<compile_context>
chip_gen: v7x
topology: tpu7x:2x2x1
jax: 0.10.0
libtpu: 0.0.40
codegen_flags: <defaults>
</compile_context>

<pallas_src>
import math
import jax
import jax.numpy as jnp
from jax import lax
from jax.experimental import pallas as pl
from jax.experimental.pallas import tpu as pltpu


def make_mamba_kernel(Lt, d_model, d_inner, d_state, dt_rank, d_conv,
                      sub_chunk, matmul_dtype):
    E, N, R, K, SC = d_inner, d_state, dt_rank, d_conv, sub_chunk
    mm = matmul_dtype

    def kernel(x_ref, w_in_ref, w_conv_ref, b_conv_ref, w_x_ref, w_dt_ref,
               b_dt_ref, A_log_ref, D_ref, w_out_ref, o_ref,
               h_s, xp_s, dlt_s, xs_s, bm_s, cm_s, y_s):
        li = pl.program_id(1)                    # position along the L-chunk axis

        # --- first chunk of this batch element: reset carried state ---------
        @pl.when(li == 0)
        def _():
            h_s[...] = jnp.zeros_like(h_s)       # SSM hidden state (N, E)
            xp_s[...] = jnp.zeros_like(xp_s)     # conv inputs (incl. zero tail)

        # --- fused in_proj: (Lt, d_model) @ (d_model, 2E); rows are already
        #     time-major since batch lives on the parallel grid axis ----------
        x2 = x_ref[...].reshape(Lt, d_model)
        xz = jnp.dot(x2.astype(mm), w_in_ref[...],
                     preferred_element_type=jnp.float32)
        z2 = xz[:, E:]                           # gate branch (Lt, E)
        # (production E is a multiple of 128, so the xz lane slices are aligned)

        # --- depthwise causal conv; persistent scratch carries the tail -----
        xp_s[pl.ds(K - 1, Lt)] = xz[:, :E]       # current chunk's conv inputs
        wc = w_conv_ref[...]                     # (K, E)
        conv = jnp.broadcast_to(b_conv_ref[...], (Lt, E))
        for k in range(K):                       # K small & static
            conv = conv + xp_s[pl.ds(k, Lt)] * wc[k:k + 1, :]
        xs = jax.nn.silu(conv)                   # (Lt, E)
        xs_s[...] = xs                           # reused by scan + skip (no u_s)
        if K > 1:                                # carry last K-1 conv inputs
            tail = xp_s[pl.ds(Lt, K - 1)]
            xp_s[pl.ds(0, K - 1)] = tail

        # --- fused x_proj: (Lt, E) @ (E, R + 2N) -----------------------------
        dbc = jnp.dot(xs.astype(mm), w_x_ref[...],
                      preferred_element_type=jnp.float32)
        if R <= 8:
            # tiny dt_rank: R broadcast multiply-adds on the VPU, no MXU pass
            d_pre = jnp.broadcast_to(b_dt_ref[...], (Lt, E))
            for r in range(R):
                d_pre = d_pre + dbc[:, r:r + 1] * w_dt_ref[r:r + 1, :]
        else:
            d_pre = jnp.dot(dbc[:, :R], w_dt_ref[...],
                            preferred_element_type=jnp.float32) + b_dt_ref[...]
        dlt_s[...] = jax.nn.softplus(d_pre)      # delta (Lt, E), f32
        bm_s[...] = dbc[:, R:R + N]              # (Lt, N)
        cm_s[...] = dbc[:, R + N:R + 2 * N]      # (Lt, N)

        A = -jnp.exp(A_log_ref[...])             # (N, E), E on lanes

        # --- selective scan: exp / BX hoisted out of the serial recurrence ---
        def outer(c, h):
            base = pl.multiple_of(c * SC, SC)
            d_c = dlt_s[pl.ds(base, SC)]                 # (SC, E)
            u_c = d_c * xs_s[pl.ds(base, SC)]            # delta * x
            b_c = bm_s[pl.ds(base, SC)]                  # (SC, N)
            c_c = cm_s[pl.ds(base, SC)]                  # (SC, N)
            dA = jnp.exp(d_c[:, None, :] * A)            # (SC, N, E)  EUP, vectorized
            bx = u_c[:, None, :] * b_c[:, :, None]       # (SC, N, E)
            hs = []
            for i in range(SC):                          # pure VPU multiply-add chain
                h = dA[i] * h + bx[i]
                hs.append(h)
            hs = jnp.stack(hs, axis=0)                   # (SC, N, E)
            y_s[pl.ds(base, SC)] = jnp.sum(hs * c_c[:, :, None], axis=1)
            return h

        h = lax.fori_loop(0, Lt // SC, outer, h_s[...])
        h_s[...] = h                                     # carry to next chunk

        # --- skip connection, silu gate, fused out_proj ----------------------
        y = y_s[...] + D_ref[...] * xs_s[...]            # (Lt, E)
        gated = y * jax.nn.silu(z2)
        out2 = jnp.dot(gated.astype(mm), w_out_ref[...],
                       preferred_element_type=jnp.float32)
        o_ref[...] = out2.reshape(1, Lt, d_model).astype(o_ref.dtype)

    return kernel


def _largest_divisor_leq(n, cap):
    cap = max(1, min(cap, n))
    for d in range(cap, 0, -1):
        if n % d == 0 and (d % 8 == 0 or d == n):
            return d
    return n


def _pick_vmem_limit():
    # Per-generation scoped VMEM limit (v7x: 64 MiB physical; v5e/v6e: 128 MiB).
    cap = None
    try:
        info = pltpu.get_tpu_info()
        cap = getattr(info, "vmem_capacity_bytes", None)
    except Exception:
        cap = None
    if cap is None:
        return 64 * 1024 * 1024
    if cap <= 64 * 1024 * 1024:                      # v7x-class: leave headroom
        return max(cap - 16 * 1024 * 1024, 32 * 1024 * 1024)
    return min(cap - 28 * 1024 * 1024, 100 * 1024 * 1024)


def mamba_block_forward(x, params, *, d_inner, d_state, dt_rank, d_conv,
                        Lt=None, sub_chunk=8, matmul_dtype=jnp.float32):
    (w_in_x, w_in_z, w_conv, b_conv, w_xd, w_xB, w_xC,
     w_dt, b_dt, A_log, D, w_out) = params
    B, L, d_model = x.shape
    E, N, R, K = d_inner, d_state, dt_rank, d_conv

    if Lt is None:
        # Derive the L-chunk from a VMEM budget instead of the full sequence.
        budget = 24 * 1024 * 1024
        per_row = 4 * (5 * E + 2 * N + 4 * d_model)
        cap = max(8, min(512, budget // max(per_row, 1)))
        Lt = _largest_divisor_leq(L, cap)
    assert L % Lt == 0, "sequence length must divide the L-chunk"
    assert Lt % 8 == 0 or Lt == L, "Lt must be a multiple of 8 or the full length"
    assert Lt >= K - 1, "L-chunk must cover the conv receptive field"
    SC = max(1, sub_chunk)
    while Lt % SC != 0:
        SC //= 2
    SC = max(SC, 1)

    # Fused / pre-transposed weights (single matmuls inside the kernel).
    w_in = jnp.concatenate([w_in_x, w_in_z], axis=1).astype(matmul_dtype)
    w_x = jnp.concatenate([w_xd, w_xB, w_xC], axis=1).astype(matmul_dtype)
    w_out_c = w_out.astype(matmul_dtype)
    A_logT = jnp.transpose(A_log)                      # (N, E): E on lanes

    kernel = make_mamba_kernel(Lt, d_model, d_inner, d_state, dt_rank, d_conv,
                               SC, matmul_dtype)
    grid = (B, L // Lt)                                # (parallel, arbitrary)

    def full_spec(a):
        nd = a.ndim
        # TODO(synk): on v7x use pipeline_mode=pl.Buffered(1) for these
        # constant-index weight blocks to halve their VMEM footprint.
        return pl.BlockSpec(a.shape, lambda bi, li, _nd=nd: (0,) * _nd)

    in_specs = [
        pl.BlockSpec((1, Lt, d_model), lambda bi, li: (bi, li, 0)),   # x
        full_spec(w_in), full_spec(w_conv), full_spec(b_conv),
        full_spec(w_x), full_spec(w_dt), full_spec(b_dt),
        full_spec(A_logT), full_spec(D), full_spec(w_out_c),
    ]
    scratch = [
        pltpu.VMEM((N, E), jnp.float32),               # h       (carried)
        pltpu.VMEM((Lt + K - 1, E), jnp.float32),      # conv in (tail carried)
        pltpu.VMEM((Lt, E), jnp.float32),              # delta
        pltpu.VMEM((Lt, E), jnp.float32),              # xs = silu(conv)
        pltpu.VMEM((Lt, N), jnp.float32),              # B
        pltpu.VMEM((Lt, N), jnp.float32),              # C
        pltpu.VMEM((Lt, E), jnp.float32),              # y
    ]

    itemsize = jnp.dtype(matmul_dtype).itemsize
    flops = int(2 * B * L * (d_model * 2 * E + E * (R + 2 * N) + E * d_model)
                + 2 * B * L * E * K + 6 * B * L * N * E)
    transcendentals = int(B * L * E * (N + 4))
    param_bytes = int((w_in.size + w_x.size + w_out_c.size) * itemsize
                      + 4 * (w_conv.size + b_conv.size + w_dt.size + b_dt.size
                             + A_logT.size + D.size))
    bytes_accessed = int(8 * B * L * d_model + param_bytes)

    out = pl.pallas_call(
        kernel,
        out_shape=jax.ShapeDtypeStruct((B, L, d_model), jnp.float32),
        grid_spec=pltpu.PrefetchScalarGridSpec(
            num_scalar_prefetch=0,
            grid=grid,
            in_specs=in_specs,
            out_specs=pl.BlockSpec((1, Lt, d_model), lambda bi, li: (bi, li, 0)),
            scratch_shapes=scratch),
        compiler_params=pltpu.CompilerParams(
            dimension_semantics=("parallel", "arbitrary"),
            vmem_limit_bytes=_pick_vmem_limit()),
        cost_estimate=pl.CostEstimate(flops=flops,
                                      transcendentals=transcendentals,
                                      bytes_accessed=bytes_accessed),
    )(x, w_in, w_conv, b_conv, w_x, w_dt, b_dt, A_logT, D, w_out_c)
    return out


def ref_forward(x, params, *, d_inner, d_state, dt_rank, d_conv):
    (w_in_x, w_in_z, w_conv, b_conv, w_xd, w_xB, w_xC,
     w_dt, b_dt, A_log, D, w_out) = params
    B, L, _ = x.shape
    xc = x @ w_in_x
    z = x @ w_in_z
    xp = jnp.pad(xc, ((0, 0), (d_conv - 1, 0), (0, 0)))
    conv = jnp.broadcast_to(b_conv[0][None, None, :], xc.shape)
    for k in range(d_conv):
        conv = conv + xp[:, k:k + L, :] * w_conv[k][None, None, :]
    xs = jax.nn.silu(conv)
    delta = jax.nn.softplus((xs @ w_xd) @ w_dt + b_dt[0])
    Bm = xs @ w_xB
    Cm = xs @ w_xC
    A = -jnp.exp(A_log)
    deltaA = jnp.exp(delta[..., None] * A)                               # (B,L,E,N)
    BX = delta[..., None] * Bm[:, :, None, :] * xs[..., None]            # (B,L,E,N)

    def step(h, inp):
        dA, bx = inp
        h = dA * h + bx
        return h, h

    h0 = jnp.zeros((B, d_inner, d_state), jnp.float32)
    _, hs = jax.lax.scan(step, h0,
                         (jnp.swapaxes(deltaA, 0, 1), jnp.swapaxes(BX, 0, 1)))
    hs = jnp.swapaxes(hs, 0, 1)                                          # (B,L,E,N)
    y = jnp.sum(hs * Cm[:, :, None, :], axis=-1) + D[0] * xs
    return (y * jax.nn.silu(z)) @ w_out


if __name__ == "__main__":
    # Config (config.bias=False, config.conv_bias=True; scan semantics match both
    # the pscan and selective_scan_seq branches of the PyTorch module).
    B, L = 16, 16
    d_model, d_inner = 32, 64
    d_state, d_conv = 16, 4
    dt_rank = max(1, math.ceil(d_model / 16))     # = 2
    dt_min, dt_max, dt_init_floor, dt_scale = 1e-3, 0.1, 1e-4, 1.0

    key = jax.random.PRNGKey(0)
    ks = jax.random.split(key, 10)

    w_in_x = 0.02 * jax.random.normal(ks[0], (d_model, d_inner), jnp.float32)
    w_in_z = 0.02 * jax.random.normal(ks[1], (d_model, d_inner), jnp.float32)
    w_conv = 0.10 * jax.random.normal(ks[2], (d_conv, d_inner), jnp.float32)
    b_conv = 0.01 * jax.random.normal(ks[3], (1, d_inner), jnp.float32)
    w_xd = 0.02 * jax.random.normal(ks[4], (d_inner, dt_rank), jnp.float32)
    w_xB = 0.02 * jax.random.normal(ks[5], (d_inner, d_state), jnp.float32)
    w_xC = 0.02 * jax.random.normal(ks[6], (d_inner, d_state), jnp.float32)

    dt_init_std = dt_rank ** (-0.5) * dt_scale
    w_dt = jax.random.uniform(ks[7], (dt_rank, d_inner), jnp.float32,
                              minval=-dt_init_std, maxval=dt_init_std)
    dt = jnp.exp(jax.random.uniform(ks[8], (d_inner,), jnp.float32)
                 * (math.log(dt_max) - math.log(dt_min)) + math.log(dt_min))
    dt = jnp.maximum(dt, dt_init_floor)
    inv_dt = dt + jnp.log(-jnp.expm1(-dt))
    b_dt = inv_dt[None, :]

    A_log = jnp.log(jnp.tile(jnp.arange(1, d_state + 1, dtype=jnp.float32)[None, :],
                             (d_inner, 1)))
    D = jnp.ones((1, d_inner), jnp.float32)
    w_out = 0.02 * jax.random.normal(ks[9], (d_inner, d_model), jnp.float32)

    params = (w_in_x, w_in_z, w_conv, b_conv, w_xd, w_xB, w_xC,
              w_dt, b_dt, A_log, D, w_out)

    x = jax.random.normal(jax.random.PRNGKey(42), (B, L, d_model), jnp.float32)
    ref = ref_forward(x, params, d_inner=d_inner, d_state=d_state,
                      dt_rank=dt_rank, d_conv=d_conv)

    # f32 matmul path: tight check against the f32 JAX reference.
    out_f32 = jax.block_until_ready(
        mamba_block_forward(x, params, d_inner=d_inner, d_state=d_state,
                            dt_rank=dt_rank, d_conv=d_conv, Lt=8,
                            matmul_dtype=jnp.float32))
    assert out_f32.shape == (B, L, d_model)
    if not jnp.allclose(out_f32, ref, atol=1e-4, rtol=1e-4):
        raise AssertionError("Pallas kernel (f32) does not match JAX reference")

    # bf16 matmul-operand path (production setting): loose sanity check.
    out_bf16 = jax.block_until_ready(
        mamba_block_forward(x, params, d_inner=d_inner, d_state=d_state,
                            dt_rank=dt_rank, d_conv=d_conv, Lt=8,
                            matmul_dtype=jnp.bfloat16))
    if not jnp.allclose(out_bf16, ref, atol=2e-3, rtol=1e-1):
        raise AssertionError("Pallas kernel (bf16 matmuls) deviates too far")

    print("KERNEL_OK")
</pallas_src>

<mosaic_0001>
module attributes {stable_mosaic.version = 11 : i64} {
  func.func @kernel(%arg0: i32, %arg1: i32, %arg2: memref<1x8x32xf32, #tpu.memory_space<vmem>>, %arg3: memref<32x128xf32, #tpu.memory_space<vmem>>, %arg4: memref<4x64xf32, #tpu.memory_space<vmem>>, %arg5: memref<1x64xf32, #tpu.memory_space<vmem>>, %arg6: memref<64x34xf32, #tpu.memory_space<vmem>>, %arg7: memref<2x64xf32, #tpu.memory_space<vmem>>, %arg8: memref<1x64xf32, #tpu.memory_space<vmem>>, %arg9: memref<16x64xf32, #tpu.memory_space<vmem>>, %arg10: memref<1x64xf32, #tpu.memory_space<vmem>>, %arg11: memref<64x32xf32, #tpu.memory_space<vmem>>, %arg12: memref<1x8x32xf32, #tpu.memory_space<vmem>>, %arg13: memref<16x64xf32, #tpu.memory_space<vmem>>, %arg14: memref<11x64xf32, #tpu.memory_space<vmem>>, %arg15: memref<8x64xf32, #tpu.memory_space<vmem>>, %arg16: memref<8x64xf32, #tpu.memory_space<vmem>>, %arg17: memref<8x16xf32, #tpu.memory_space<vmem>>, %arg18: memref<8x16xf32, #tpu.memory_space<vmem>>, %arg19: memref<8x64xf32, #tpu.memory_space<vmem>>) attributes {dimension_semantics = [#tpu.dimension_semantics<parallel>, #tpu.dimension_semantics<arbitrary>], iteration_bounds = array<i64: 16, 2>, scalar_prefetch = 0 : i64, scratch_operands = 7 : i64, tpu.core_type = #tpu.core_type<tc>, window_params = [{transform_indices = @transform_0, window_bounds = array<i64: 1, 8, 32>}, {pipeline_mode = #tpu.pipeline_mode<synchronous>, transform_indices = @transform_1, window_bounds = array<i64: 32, 128>}, {pipeline_mode = #tpu.pipeline_mode<synchronous>, transform_indices = @transform_2, window_bounds = array<i64: 4, 64>}, {pipeline_mode = #tpu.pipeline_mode<synchronous>, transform_indices = @transform_3, window_bounds = array<i64: 1, 64>}, {pipeline_mode = #tpu.pipeline_mode<synchronous>, transform_indices = @transform_4, window_bounds = array<i64: 64, 34>}, {pipeline_mode = #tpu.pipeline_mode<synchronous>, transform_indices = @transform_5, window_bounds = array<i64: 2, 64>}, {pipeline_mode = #tpu.pipeline_mode<synchronous>, transform_indices = @transform_6, window_bounds = array<i64: 1, 64>}, {pipeline_mode = #tpu.pipeline_mode<synchronous>, transform_indices = @transform_7, window_bounds = array<i64: 16, 64>}, {pipeline_mode = #tpu.pipeline_mode<synchronous>, transform_indices = @transform_8, window_bounds = array<i64: 1, 64>}, {pipeline_mode = #tpu.pipeline_mode<synchronous>, transform_indices = @transform_9, window_bounds = array<i64: 64, 32>}, {transform_indices = @transform_10, window_bounds = array<i64: 1, 8, 32>}]} {
    %c0_i32 = arith.constant 0 : i32
    %0 = arith.cmpi eq, %arg1, %c0_i32 : i32
    %1 = arith.extui %0 : i1 to i32
    %c0_i32_0 = arith.constant 0 : i32
    %2 = arith.cmpi ne, %1, %c0_i32_0 : i32
    scf.if %2 {
      %cst_66 = arith.constant 0.000000e+00 : f32
      %187 = vector.broadcast %cst_66 : f32 to vector<16x64xf32>
      %c0_67 = arith.constant 0 : index
      %c0_68 = arith.constant 0 : index
      %188 = vector.load %arg13[%c0_67, %c0_68] : memref<16x64xf32, #tpu.memory_space<vmem>>, vector<16x64xf32>
      tpu.vector_store %arg13[%c0_67, %c0_68], %187 {strides = array<i32>} : memref<16x64xf32, #tpu.memory_space<vmem>>, vector<16x64xf32>,
      %cst_69 = arith.constant 0.000000e+00 : f32
      %189 = vector.broadcast %cst_69 : f32 to vector<11x64xf32>
      %c0_70 = arith.constant 0 : index
      %c0_71 = arith.constant 0 : index
      %190 = vector.load %arg14[%c0_70, %c0_71] : memref<11x64xf32, #tpu.memory_space<vmem>>, vector<11x64xf32>
      tpu.vector_store %arg14[%c0_70, %c0_71], %189 {strides = array<i32>} : memref<11x64xf32, #tpu.memory_space<vmem>>, vector<11x64xf32>,
    } else {
    }
    %c0 = arith.constant 0 : index
    %c0_1 = arith.constant 0 : index
    %c0_2 = arith.constant 0 : index
    %3 = vector.load %arg2[%c0, %c0_1, %c0_2] : memref<1x8x32xf32, #tpu.memory_space<vmem>>, vector<1x8x32xf32>
    %4 = vector.shape_cast %3 : vector<1x8x32xf32> to vector<8x32xf32>
    %c0_3 = arith.constant 0 : index
    %c0_4 = arith.constant 0 : index
    %5 = vector.load %arg3[%c0_3, %c0_4] : memref<32x128xf32, #tpu.memory_space<vmem>>, vector<32x128xf32>
    %cst = arith.constant dense<0.000000e+00> : vector<8x128xf32>
    %6 = tpu.matmul %4, %5, %cst {dimension_numbers = #tpu.dot_dimension_numbers<[1], [0], [0], [1], [0, 0, 1, 1], [], []>} : vector<8x32xf32>, vector<32x128xf32>, vector<8x128xf32> -> vector<8x128xf32>
    %7 = vector.extract_strided_slice %6 {offsets = [0, 64], sizes = [8, 64], strides = [1, 1]} : vector<8x128xf32> to vector<8x64xf32>
    %8 = vector.extract_strided_slice %6 {offsets = [0, 0], sizes = [8, 64], strides = [1, 1]} : vector<8x128xf32> to vector<8x64xf32>
    %c3 = arith.constant 3 : index
    %c0_5 = arith.constant 0 : index
    %9 = vector.load %arg14[%c3, %c0_5] : memref<11x64xf32, #tpu.memory_space<vmem>>, vector<8x64xf32>
    tpu.vector_store %arg14[%c3, %c0_5], %8 {strides = array<i32>} : memref<11x64xf32, #tpu.memory_space<vmem>>, vector<8x64xf32>,
    %c0_6 = arith.constant 0 : index
    %c0_7 = arith.constant 0 : index
    %10 = vector.load %arg4[%c0_6, %c0_7] : memref<4x64xf32, #tpu.memory_space<vmem>>, vector<4x64xf32>
    %c0_8 = arith.constant 0 : index
    %c0_9 = arith.constant 0 : index
    %11 = vector.load %arg5[%c0_8, %c0_9] : memref<1x64xf32, #tpu.memory_space<vmem>>, vector<1x64xf32>
    %12 = vector.shape_cast %11 : vector<1x64xf32> to vector<1x64xf32>
    %13 = vector.broadcast %12 : vector<1x64xf32> to vector<8x64xf32>
    %c0_10 = arith.constant 0 : index
    %c0_11 = arith.constant 0 : index
    %14 = vector.load %arg14[%c0_10, %c0_11] : memref<11x64xf32, #tpu.memory_space<vmem>>, vector<8x64xf32>
    %15 = vector.extract_strided_slice %10 {offsets = [0, 0], sizes = [1, 64], strides = [1, 1]} : vector<4x64xf32> to vector<1x64xf32>
    %16 = vector.broadcast %15 : vector<1x64xf32> to vector<8x64xf32>
    %17 = arith.mulf %14, %16 : vector<8x64xf32>
    %18 = arith.addf %13, %17 : vector<8x64xf32>
    %c1 = arith.constant 1 : index
    %c0_12 = arith.constant 0 : index
    %19 = vector.load %arg14[%c1, %c0_12] : memref<11x64xf32, #tpu.memory_space<vmem>>, vector<8x64xf32>
    %20 = vector.extract_strided_slice %10 {offsets = [1, 0], sizes = [1, 64], strides = [1, 1]} : vector<4x64xf32> to vector<1x64xf32>
    %21 = vector.broadcast %20 : vector<1x64xf32> to vector<8x64xf32>
    %22 = arith.mulf %19, %21 : vector<8x64xf32>
    %23 = arith.addf %18, %22 : vector<8x64xf32>
    %c2 = arith.constant 2 : index
    %c0_13 = arith.constant 0 : index
    %24 = vector.load %arg14[%c2, %c0_13] : memref<11x64xf32, #tpu.memory_space<vmem>>, vector<8x64xf32>
    %25 = vector.extract_strided_slice %10 {offsets = [2, 0], sizes = [1, 64], strides = [1, 1]} : vector<4x64xf32> to vector<1x64xf32>
    %26 = vector.broadcast %25 : vector<1x64xf32> to vector<8x64xf32>
    %27 = arith.mulf %24, %26 : vector<8x64xf32>
    %28 = arith.addf %23, %27 : vector<8x64xf32>
    %c3_14 = arith.constant 3 : index
    %c0_15 = arith.constant 0 : index
    %29 = vector.load %arg14[%c3_14, %c0_15] : memref<11x64xf32, #tpu.memory_space<vmem>>, vector<8x64xf32>
    %30 = vector.extract_strided_slice %10 {offsets = [3, 0], sizes = [1, 64], strides = [1, 1]} : vector<4x64xf32> to vector<1x64xf32>
    %31 = vector.broadcast %30 : vector<1x64xf32> to vector<8x64xf32>
    %32 = arith.mulf %29, %31 : vector<8x64xf32>
    %33 = arith.addf %28, %32 : vector<8x64xf32>
    %34 = arith.negf %33 : vector<8x64xf32>
    %35 = math.exp %34 : vector<8x64xf32>
    %cst_16 = arith.constant 1.000000e+00 : f32
    %36 = vector.broadcast %cst_16 : f32 to vector<8x64xf32>
    %37 = arith.addf %36, %35 : vector<8x64xf32>
    %38 = arith.divf %36, %37 : vector<8x64xf32>
    %39 = arith.mulf %33, %38 : vector<8x64xf32>
    %c0_17 = arith.constant 0 : index
    %c0_18 = arith.constant 0 : index
    %40 = vector.load %arg16[%c0_17, %c0_18] : memref<8x64xf32, #tpu.memory_space<vmem>>, vector<8x64xf32>
    tpu.vector_store %arg16[%c0_17, %c0_18], %39 {strides = array<i32>} : memref<8x64xf32, #tpu.memory_space<vmem>>, vector<8x64xf32>,
    %c8 = arith.constant 8 : index
    %c0_19 = arith.constant 0 : index
    %41 = vector.load %arg14[%c8, %c0_19] : memref<11x64xf32, #tpu.memory_space<vmem>>, vector<3x64xf32>
    %c0_20 = arith.constant 0 : index
    %c0_21 = arith.constant 0 : index
    %42 = vector.load %arg14[%c0_20, %c0_21] : memref<11x64xf32, #tpu.memory_space<vmem>>, vector<3x64xf32>
    tpu.vector_store %arg14[%c0_20, %c0_21], %41 {strides = array<i32>} : memref<11x64xf32, #tpu.memory_space<vmem>>, vector<3x64xf32>,
    %c0_22 = arith.constant 0 : index
    %c0_23 = arith.constant 0 : index
    %43 = vector.load %arg6[%c0_22, %c0_23] : memref<64x34xf32, #tpu.memory_space<vmem>>, vector<64x34xf32>
    %cst_24 = arith.constant dense<0.000000e+00> : vector<8x34xf32>
    %44 = tpu.matmul %39, %43, %cst_24 {dimension_numbers = #tpu.dot_dimension_numbers<[1], [0], [0], [1], [0, 0, 1, 1], [], []>} : vector<8x64xf32>, vector<64x34xf32>, vector<8x34xf32> -> vector<8x34xf32>
    %c0_25 = arith.constant 0 : index
    %c0_26 = arith.constant 0 : index
    %45 = vector.load %arg8[%c0_25, %c0_26] : memref<1x64xf32, #tpu.memory_space<vmem>>, vector<1x64xf32>
    %46 = vector.shape_cast %45 : vector<1x64xf32> to vector<1x64xf32>
    %47 = vector.broadcast %46 : vector<1x64xf32> to vector<8x64xf32>
    %48 = vector.extract_strided_slice %44 {offsets = [0, 0], sizes = [8, 1], strides = [1, 1]} : vector<8x34xf32> to vector<8x1xf32>
    %c0_27 = arith.constant 0 : index
    %c0_28 = arith.constant 0 : index
    %49 = vector.load %arg7[%c0_27, %c0_28] : memref<2x64xf32, #tpu.memory_space<vmem>>, vector<1x64xf32>
    %50 = vector.broadcast %48 : vector<8x1xf32> to vector<8x64xf32>
    %51 = vector.broadcast %49 : vector<1x64xf32> to vector<8x64xf32>
    %52 = arith.mulf %50, %51 : vector<8x64xf32>
    %53 = arith.addf %47, %52 : vector<8x64xf32>
    %54 = vector.extract_strided_slice %44 {offsets = [0, 1], sizes = [8, 1], strides = [1, 1]} : vector<8x34xf32> to vector<8x1xf32>
    %c1_29 = arith.constant 1 : index
    %c0_30 = arith.constant 0 : index
    %55 = vector.load %arg7[%c1_29, %c0_30] : memref<2x64xf32, #tpu.memory_space<vmem>>, vector<1x64xf32>
    %56 = vector.broadcast %54 : vector<8x1xf32> to vector<8x64xf32>
    %57 = vector.broadcast %55 : vector<1x64xf32> to vector<8x64xf32>
    %58 = arith.mulf %56, %57 : vector<8x64xf32>
    %59 = arith.addf %53, %58 : vector<8x64xf32>
    %cst_31 = arith.constant 0.000000e+00 : f32
    %60 = vector.broadcast %cst_31 : f32 to vector<8x64xf32>
    %61 = arith.maximumf %59, %60 : vector<8x64xf32>
    %62 = vector.broadcast %cst_31 : f32 to vector<8x64xf32>
    %63 = arith.subf %59, %62 : vector<8x64xf32>
    %64 = arith.cmpf one, %63, %63 : vector<8x64xf32>
    %65 = vector.broadcast %cst_31 : f32 to vector<8x64xf32>
    %66 = arith.addf %59, %65 : vector<8x64xf32>
    %67 = math.absf %63 : vector<8x64xf32>
    %cst_32 = arith.constant 0.000000e+00 : f32
    %68 = vector.broadcast %cst_32 : f32 to vector<8x64xf32>
    %69 = arith.subf %68, %67 : vector<8x64xf32>
    %70 = math.exp %69 : vector<8x64xf32>
    %71 = math.log1p %70 : vector<8x64xf32>
    %72 = arith.addf %61, %71 : vector<8x64xf32>
    %73 = arith.select %64, %66, %72 : vector<8x64xi1>, vector<8x64xf32>
    %c0_33 = arith.constant 0 : index
    %c0_34 = arith.constant 0 : index
    %74 = vector.load %arg15[%c0_33, %c0_34] : memref<8x64xf32, #tpu.memory_space<vmem>>, vector<8x64xf32>
    tpu.vector_store %arg15[%c0_33, %c0_34], %73 {strides = array<i32>} : memref<8x64xf32, #tpu.memory_space<vmem>>, vector<8x64xf32>,
    %75 = vector.extract_strided_slice %44 {offsets = [0, 2], sizes = [8, 16], strides = [1, 1]} : vector<8x34xf32> to vector<8x16xf32>
    %c0_35 = arith.constant 0 : index
    %c0_36 = arith.constant 0 : index
    %76 = vector.load %arg17[%c0_35, %c0_36] : memref<8x16xf32, #tpu.memory_space<vmem>>, vector<8x16xf32>
    tpu.vector_store %arg17[%c0_35, %c0_36], %75 {strides = array<i32>} : memref<8x16xf32, #tpu.memory_space<vmem>>, vector<8x16xf32>,
    %77 = vector.extract_strided_slice %44 {offsets = [0, 18], sizes = [8, 16], strides = [1, 1]} : vector<8x34xf32> to vector<8x16xf32>
    %c0_37 = arith.constant 0 : index
    %c0_38 = arith.constant 0 : index
    %78 = vector.load %arg18[%c0_37, %c0_38] : memref<8x16xf32, #tpu.memory_space<vmem>>, vector<8x16xf32>
    tpu.vector_store %arg18[%c0_37, %c0_38], %77 {strides = array<i32>} : memref<8x16xf32, #tpu.memory_space<vmem>>, vector<8x16xf32>,
    %c0_39 = arith.constant 0 : index
    %c0_40 = arith.constant 0 : index
    %79 = vector.load %arg9[%c0_39, %c0_40] : memref<16x64xf32, #tpu.memory_space<vmem>>, vector<16x64xf32>
    %80 = math.exp %79 : vector<16x64xf32>
    %cst_41 = arith.constant 0.000000e+00 : f32
    %81 = vector.broadcast %cst_41 : f32 to vector<16x64xf32>
    %82 = arith.subf %81, %80 : vector<16x64xf32>
    %c0_42 = arith.constant 0 : index
    %c0_43 = arith.constant 0 : index
    %83 = vector.load %arg13[%c0_42, %c0_43] : memref<16x64xf32, #tpu.memory_space<vmem>>, vector<16x64xf32>
    %c0_i32_44 = arith.constant 0 : i32
    %c8_i32 = arith.constant 8 : i32
    %84 = arith.muli %c0_i32_44, %c8_i32 : i32
    %85 = tpu.assume_multiple %84, 8 : i32
    %86 = arith.index_cast %85 : i32 to index
    %c0_45 = arith.constant 0 : index
    %87 = vector.load %arg15[%86, %c0_45] : memref<8x64xf32, #tpu.memory_space<vmem>>, vector<8x64xf32>
    %88 = arith.index_cast %85 : i32 to index
    %c0_46 = arith.constant 0 : index
    %89 = vector.load %arg16[%88, %c0_46] : memref<8x64xf32, #tpu.memory_space<vmem>>, vector<8x64xf32>
    %90 = arith.mulf %87, %89 : vector<8x64xf32>
    %91 = arith.index_cast %85 : i32 to index
    %c0_47 = arith.constant 0 : index
    %92 = vector.load %arg17[%91, %c0_47] : memref<8x16xf32, #tpu.memory_space<vmem>>, vector<8x16xf32>
    %93 = arith.index_cast %85 : i32 to index
    %c0_48 = arith.constant 0 : index
    %94 = vector.load %arg18[%93, %c0_48] : memref<8x16xf32, #tpu.memory_space<vmem>>, vector<8x16xf32>
    %95 = vector.shape_cast %87 : vector<8x64xf32> to vector<8x1x64xf32>
    %96 = vector.shape_cast %82 : vector<16x64xf32> to vector<1x16x64xf32>
    %97 = vector.broadcast %95 : vector<8x1x64xf32> to vector<8x16x64xf32>
    %98 = vector.broadcast %96 : vector<1x16x64xf32> to vector<8x16x64xf32>
    %99 = arith.mulf %97, %98 : vector<8x16x64xf32>
    %100 = math.exp %99 : vector<8x16x64xf32>
    %101 = vector.shape_cast %90 : vector<8x64xf32> to vector<8x1x64xf32>
    %102 = vector.shape_cast %92 : vector<8x16xf32> to vector<8x16x1xf32>
    %103 = vector.broadcast %101 : vector<8x1x64xf32> to vector<8x16x64xf32>
    %104 = vector.broadcast %102 : vector<8x16x1xf32> to vector<8x16x64xf32>
    %105 = arith.mulf %103, %104 : vector<8x16x64xf32>
    %106 = vector.extract_strided_slice %100 {offsets = [0, 0, 0], sizes = [1, 16, 64], strides = [1, 1, 1]} : vector<8x16x64xf32> to vector<1x16x64xf32>
    %107 = vector.shape_cast %106 : vector<1x16x64xf32> to vector<16x64xf32>
    %108 = arith.mulf %107, %83 : vector<16x64xf32>
    %109 = vector.extract_strided_slice %105 {offsets = [0, 0, 0], sizes = [1, 16, 64], strides = [1, 1, 1]} : vector<8x16x64xf32> to vector<1x16x64xf32>
    %110 = vector.shape_cast %109 : vector<1x16x64xf32> to vector<16x64xf32>
    %111 = arith.addf %108, %110 : vector<16x64xf32>
    %112 = vector.extract_strided_slice %100 {offsets = [1, 0, 0], sizes = [1, 16, 64], strides = [1, 1, 1]} : vector<8x16x64xf32> to vector<1x16x64xf32>
    %113 = vector.shape_cast %112 : vector<1x16x64xf32> to vector<16x64xf32>
    %114 = arith.mulf %113, %111 : vector<16x64xf32>
    %115 = vector.extract_strided_slice %105 {offsets = [1, 0, 0], sizes = [1, 16, 64], strides = [1, 1, 1]} : vector<8x16x64xf32> to vector<1x16x64xf32>
    %116 = vector.shape_cast %115 : vector<1x16x64xf32> to vector<16x64xf32>
    %117 = arith.addf %114, %116 : vector<16x64xf32>
    %118 = vector.extract_strided_slice %100 {offsets = [2, 0, 0], sizes = [1, 16, 64], strides = [1, 1, 1]} : vector<8x16x64xf32> to vector<1x16x64xf32>
    %119 = vector.shape_cast %118 : vector<1x16x64xf32> to vector<16x64xf32>
    %120 = arith.mulf %119, %117 : vector<16x64xf32>
    %121 = vector.extract_strided_slice %105 {offsets = [2, 0, 0], sizes = [1, 16, 64], strides = [1, 1, 1]} : vector<8x16x64xf32> to vector<1x16x64xf32>
    %122 = vector.shape_cast %121 : vector<1x16x64xf32> to vector<16x64xf32>
    %123 = arith.addf %120, %122 : vector<16x64xf32>
    %124 = vector.extract_strided_slice %100 {offsets = [3, 0, 0], sizes = [1, 16, 64], strides = [1, 1, 1]} : vector<8x16x64xf32> to vector<1x16x64xf32>
    %125 = vector.shape_cast %124 : vector<1x16x64xf32> to vector<16x64xf32>
    %126 = arith.mulf %125, %123 : vector<16x64xf32>
    %127 = vector.extract_strided_slice %105 {offsets = [3, 0, 0], sizes = [1, 16, 64], strides = [1, 1, 1]} : vector<8x16x64xf32> to vector<1x16x64xf32>
    %128 = vector.shape_cast %127 : vector<1x16x64xf32> to vector<16x64xf32>
    %129 = arith.addf %126, %128 : vector<16x64xf32>
    %130 = vector.extract_strided_slice %100 {offsets = [4, 0, 0], sizes = [1, 16, 64], strides = [1, 1, 1]} : vector<8x16x64xf32> to vector<1x16x64xf32>
    %131 = vector.shape_cast %130 : vector<1x16x64xf32> to vector<16x64xf32>
    %132 = arith.mulf %131, %129 : vector<16x64xf32>
    %133 = vector.extract_strided_slice %105 {offsets = [4, 0, 0], sizes = [1, 16, 64], strides = [1, 1, 1]} : vector<8x16x64xf32> to vector<1x16x64xf32>
    %134 = vector.shape_cast %133 : vector<1x16x64xf32> to vector<16x64xf32>
    %135 = arith.addf %132, %134 : vector<16x64xf32>
    %136 = vector.extract_strided_slice %100 {offsets = [5, 0, 0], sizes = [1, 16, 64], strides = [1, 1, 1]} : vector<8x16x64xf32> to vector<1x16x64xf32>
    %137 = vector.shape_cast %136 : vector<1x16x64xf32> to vector<16x64xf32>
    %138 = arith.mulf %137, %135 : vector<16x64xf32>
    %139 = vector.extract_strided_slice %105 {offsets = [5, 0, 0], sizes = [1, 16, 64], strides = [1, 1, 1]} : vector<8x16x64xf32> to vector<1x16x64xf32>
    %140 = vector.shape_cast %139 : vector<1x16x64xf32> to vector<16x64xf32>
    %141 = arith.addf %138, %140 : vector<16x64xf32>
    %142 = vector.extract_strided_slice %100 {offsets = [6, 0, 0], sizes = [1, 16, 64], strides = [1, 1, 1]} : vector<8x16x64xf32> to vector<1x16x64xf32>
    %143 = vector.shape_cast %142 : vector<1x16x64xf32> to vector<16x64xf32>
    %144 = arith.mulf %143, %141 : vector<16x64xf32>
    %145 = vector.extract_strided_slice %105 {offsets = [6, 0, 0], sizes = [1, 16, 64], strides = [1, 1, 1]} : vector<8x16x64xf32> to vector<1x16x64xf32>
    %146 = vector.shape_cast %145 : vector<1x16x64xf32> to vector<16x64xf32>
    %147 = arith.addf %144, %146 : vector<16x64xf32>
    %148 = vector.extract_strided_slice %100 {offsets = [7, 0, 0], sizes = [1, 16, 64], strides = [1, 1, 1]} : vector<8x16x64xf32> to vector<1x16x64xf32>
    %149 = vector.shape_cast %148 : vector<1x16x64xf32> to vector<16x64xf32>
    %150 = arith.mulf %149, %147 : vector<16x64xf32>
    %151 = vector.extract_strided_slice %105 {offsets = [7, 0, 0], sizes = [1, 16, 64], strides = [1, 1, 1]} : vector<8x16x64xf32> to vector<1x16x64xf32>
    %152 = vector.shape_cast %151 : vector<1x16x64xf32> to vector<16x64xf32>
    %153 = arith.addf %150, %152 : vector<16x64xf32>
    %154 = vector.shape_cast %111 : vector<16x64xf32> to vector<1x16x64xf32>
    %155 = vector.shape_cast %117 : vector<16x64xf32> to vector<1x16x64xf32>
    %156 = vector.shape_cast %123 : vector<16x64xf32> to vector<1x16x64xf32>
    %157 = vector.shape_cast %129 : vector<16x64xf32> to vector<1x16x64xf32>
    %158 = vector.shape_cast %135 : vector<16x64xf32> to vector<1x16x64xf32>
    %159 = vector.shape_cast %141 : vector<16x64xf32> to vector<1x16x64xf32>
    %160 = vector.shape_cast %147 : vector<16x64xf32> to vector<1x16x64xf32>
    %161 = vector.shape_cast %153 : vector<16x64xf32> to vector<1x16x64xf32>
    %162 = tpu.concatenate %154, %155, %156, %157, %158, %159, %160, %161 in 0 : vector<1x16x64xf32>, vector<1x16x64xf32>, vector<1x16x64xf32>, vector<1x16x64xf32>, vector<1x16x64xf32>, vector<1x16x64xf32>, vector<1x16x64xf32>, vector<1x16x64xf32> -> vector<8x16x64xf32>
    %163 = vector.shape_cast %94 : vector<8x16xf32> to vector<8x16x1xf32>
    %164 = vector.broadcast %163 : vector<8x16x1xf32> to vector<8x16x64xf32>
    %165 = arith.mulf %162, %164 : vector<8x16x64xf32>
    %cst_49 = arith.constant dense<0.000000e+00> : vector<8x64xf32>
    %166 = vector.multi_reduction <add>, %165, %cst_49 [1] : vector<8x16x64xf32> to vector<8x64xf32>
    %167 = arith.index_cast %85 : i32 to index
    %c0_50 = arith.constant 0 : index
    %168 = vector.load %arg19[%167, %c0_50] : memref<8x64xf32, #tpu.memory_space<vmem>>, vector<8x64xf32>
    tpu.vector_store %arg19[%167, %c0_50], %166 {strides = array<i32>} : memref<8x64xf32, #tpu.memory_space<vmem>>, vector<8x64xf32>,
    %c1_i32 = arith.constant 1 : i32
    %c0_51 = arith.constant 0 : index
    %c0_52 = arith.constant 0 : index
    %169 = vector.load %arg13[%c0_51, %c0_52] : memref<16x64xf32, #tpu.memory_space<vmem>>, vector<16x64xf32>
    tpu.vector_store %arg13[%c0_51, %c0_52], %153 {strides = array<i32>} : memref<16x64xf32, #tpu.memory_space<vmem>>, vector<16x64xf32>,
    %c0_53 = arith.constant 0 : index
    %c0_54 = arith.constant 0 : index
    %170 = vector.load %arg19[%c0_53, %c0_54] : memref<8x64xf32, #tpu.memory_space<vmem>>, vector<8x64xf32>
    %c0_55 = arith.constant 0 : index
    %c0_56 = arith.constant 0 : index
    %171 = vector.load %arg10[%c0_55, %c0_56] : memref<1x64xf32, #tpu.memory_space<vmem>>, vector<1x64xf32>
    %c0_57 = arith.constant 0 : index
    %c0_58 = arith.constant 0 : index
    %172 = vector.load %arg16[%c0_57, %c0_58] : memref<8x64xf32, #tpu.memory_space<vmem>>, vector<8x64xf32>
    %173 = vector.broadcast %171 : vector<1x64xf32> to vector<8x64xf32>
    %174 = arith.mulf %173, %172 : vector<8x64xf32>
    %175 = arith.addf %170, %174 : vector<8x64xf32>
    %176 = arith.negf %7 : vector<8x64xf32>
    %177 = math.exp %176 : vector<8x64xf32>
    %cst_59 = arith.constant 1.000000e+00 : f32
    %178 = vector.broadcast %cst_59 : f32 to vector<8x64xf32>
    %179 = arith.addf %178, %177 : vector<8x64xf32>
    %180 = arith.divf %178, %179 : vector<8x64xf32>
    %181 = arith.mulf %7, %180 : vector<8x64xf32>
    %182 = arith.mulf %175, %181 : vector<8x64xf32>
    %c0_60 = arith.constant 0 : index
    %c0_61 = arith.constant 0 : index
    %183 = vector.load %arg11[%c0_60, %c0_61] : memref<64x32xf32, #tpu.memory_space<vmem>>, vector<64x32xf32>
    %cst_62 = arith.constant dense<0.000000e+00> : vector<8x32xf32>
    %184 = tpu.matmul %182, %183, %cst_62 {dimension_numbers = #tpu.dot_dimension_numbers<[1], [0], [0], [1], [0, 0, 1, 1], [], []>} : vector<8x64xf32>, vector<64x32xf32>, vector<8x32xf32> -> vector<8x32xf32>
    %185 = vector.shape_cast %184 : vector<8x32xf32> to vector<1x8x32xf32>
    %c0_63 = arith.constant 0 : index
    %c0_64 = arith.constant 0 : index
    %c0_65 = arith.constant 0 : index
    %186 = vector.load %arg12[%c0_63, %c0_64, %c0_65] : memref<1x8x32xf32, #tpu.memory_space<vmem>>, vector<1x8x32xf32>
    tpu.vector_store %arg12[%c0_63, %c0_64, %c0_65], %185 {strides = array<i32>} : memref<1x8x32xf32, #tpu.memory_space<vmem>>, vector<1x8x32xf32>,
    return
  }
  func.func @transform_0(%arg0: i32, %arg1: i32) -> (i32, i32, i32) {
    %c0_i32 = arith.constant 0 : i32
    %c0_i32_0 = arith.constant 0 : i32
    return %arg0, %arg1, %c0_i32 : i32, i32, i32
  }
  func.func @transform_1(%arg0: i32, %arg1: i32) -> (i32, i32) {
    %c0_i32 = arith.constant 0 : i32
    %c0_i32_0 = arith.constant 0 : i32
    %c0_i32_1 = arith.constant 0 : i32
    return %c0_i32, %c0_i32_0 : i32, i32
  }
  func.func @transform_2(%arg0: i32, %arg1: i32) -> (i32, i32) {
    %c0_i32 = arith.constant 0 : i32
    %c0_i32_0 = arith.constant 0 : i32
    %c0_i32_1 = arith.constant 0 : i32
    return %c0_i32, %c0_i32_0 : i32, i32
  }
  func.func @transform_3(%arg0: i32, %arg1: i32) -> (i32, i32) {
    %c0_i32 = arith.constant 0 : i32
    %c0_i32_0 = arith.constant 0 : i32
    %c0_i32_1 = arith.constant 0 : i32
    return %c0_i32, %c0_i32_0 : i32, i32
  }
  func.func @transform_4(%arg0: i32, %arg1: i32) -> (i32, i32) {
    %c0_i32 = arith.constant 0 : i32
    %c0_i32_0 = arith.constant 0 : i32
    %c0_i32_1 = arith.constant 0 : i32
    return %c0_i32, %c0_i32_0 : i32, i32
  }
  func.func @transform_5(%arg0: i32, %arg1: i32) -> (i32, i32) {
    %c0_i32 = arith.constant 0 : i32
    %c0_i32_0 = arith.constant 0 : i32
    %c0_i32_1 = arith.constant 0 : i32
    return %c0_i32, %c0_i32_0 : i32, i32
  }
  func.func @transform_6(%arg0: i32, %arg1: i32) -> (i32, i32) {
    %c0_i32 = arith.constant 0 : i32
    %c0_i32_0 = arith.constant 0 : i32
    %c0_i32_1 = arith.constant 0 : i32
    return %c0_i32, %c0_i32_0 : i32, i32
  }
  func.func @transform_7(%arg0: i32, %arg1: i32) -> (i32, i32) {
    %c0_i32 = arith.constant 0 : i32
    %c0_i32_0 = arith.constant 0 : i32
    %c0_i32_1 = arith.constant 0 : i32
    return %c0_i32, %c0_i32_0 : i32, i32
  }
  func.func @transform_8(%arg0: i32, %arg1: i32) -> (i32, i32) {
    %c0_i32 = arith.constant 0 : i32
    %c0_i32_0 = arith.constant 0 : i32
    %c0_i32_1 = arith.constant 0 : i32
    return %c0_i32, %c0_i32_0 : i32, i32
  }
  func.func @transform_9(%arg0: i32, %arg1: i32) -> (i32, i32) {
    %c0_i32 = arith.constant 0 : i32
    %c0_i32_0 = arith.constant 0 : i32
    %c0_i32_1 = arith.constant 0 : i32
    return %c0_i32, %c0_i32_0 : i32, i32
  }
  func.func @transform_10(%arg0: i32, %arg1: i32) -> (i32, i32, i32) {
    %c0_i32 = arith.constant 0 : i32
    %c0_i32_0 = arith.constant 0 : i32
    return %arg0, %arg1, %c0_i32 : i32, i32, i32
  }
}

</mosaic_0001>

<llo_original>
// kernel: tpu_custom_call.1
$region0: #{tpu_custom_call.1}
  #allocation0 [shape = 'u32[]', space=smem, size = 0x4, offset = 0x4, fixed_abs, tag = 'smem constant byte address 0x4 - core index']
  #allocation1 [shape = 'u32[144,128]{1,0:T(1,128)}', space=vmem, size = 0x12000, scoped, tag = 'internal scratch']
  #allocation2 [shape = 'f32[16,64]{1,0:T(8,128)}', space=vmem, size = 0x2000, scoped, tag = 'scratch operand']
  #allocation3 [shape = 'f32[11,64]{1,0:T(8,128)}', space=vmem, size = 0x2000, scoped, tag = 'scratch operand']
  #allocation4 [shape = 'f32[8,64]{1,0:T(8,128)}', space=vmem, size = 0x1000, scoped, tag = 'scratch operand']
  #allocation5 [shape = 'f32[8,64]{1,0:T(8,128)}', space=vmem, size = 0x1000, scoped, tag = 'scratch operand']
  #allocation6 [shape = 'f32[8,16]{1,0:T(8,128)}', space=vmem, size = 0x1000, scoped, tag = 'scratch operand']
  #allocation7 [shape = 'f32[8,16]{1,0:T(8,128)}', space=vmem, size = 0x1000, scoped, tag = 'scratch operand']
  #allocation8 [shape = 'f32[8,64]{1,0:T(8,128)}', space=vmem, size = 0x1000, scoped, tag = 'scratch operand']
  %s0 = inlined_call_operand.hbm [shape: f32[16,16,32], index: 0, kind: input, shape index: {}]
  %s1 = inlined_call_operand.hbm [shape: f32[32,128], index: 1, kind: input, shape index: {}]
  %s2 = inlined_call_operand.hbm [shape: f32[4,64], index: 2, kind: input, shape index: {}]
  %s3 = inlined_call_operand.hbm [shape: f32[1,64], index: 3, kind: input, shape index: {}]
  %s4 = inlined_call_operand.hbm [shape: f32[64,34], index: 4, kind: input, shape index: {}]
  %s5 = inlined_call_operand.hbm [shape: f32[2,64], index: 5, kind: input, shape index: {}]
  %s6 = inlined_call_operand.hbm [shape: f32[1,64], index: 6, kind: input, shape index: {}]
  %s7 = inlined_call_operand.hbm [shape: f32[16,64], index: 7, kind: input, shape index: {}]
  %s8 = inlined_call_operand.hbm [shape: f32[1,64], index: 8, kind: input, shape index: {}]
  %s9 = inlined_call_operand.hbm [shape: f32[64,32], index: 9, kind: input, shape index: {}]
  %s10 = inlined_call_operand.hbm [shape: f32[16,16,32], index: 10, kind: output, shape index: {}]
  %s11 = sld [smem:[#allocation0]]
  $region117: #{tpu_custom_call.1} parent=0
    _
  %s13 = ssub.s32 1, %s11
  %s14 = scalar_select 0, %s13, %s11
  $region1: #{tpu_custom_call.1} parent=0
    #allocation9 [shape = 'u8[8192]{0}', space=vmem, size = 0x2000, scoped, tag = 'input window, operand 0']
    #allocation10 [shape = 's32[2]{0}', space=sflag, size = 0x8, scoped, tag = 'scoped memory for tpu_custom_call.1']
    #allocation11 [shape = 's32[2]{0}', space=sflag, size = 0x8, scoped, tag = 'scoped memory for tpu_custom_call.1']
    #allocation12 [shape = 'u8[16384]{0}', space=vmem, size = 0x4000, scoped, tag = 'input window, operand 1, single buffered']
    #allocation13 [shape = 's32[1]{0}', space=sflag, size = 0x4, scoped, tag = 'scoped memory for tpu_custom_call.1']
    #allocation14 [shape = 'u8[2048]{0}', space=vmem, size = 0x800, scoped, tag = 'input window, operand 2, single buffered']
    #allocation15 [shape = 'u8[512]{0}', space=vmem, size = 0x400, scoped, tag = 'input window, operand 3, single buffered']
    #allocation16 [shape = 's32[1]{0}', space=sflag, size = 0x4, scoped, tag = 'scoped memory for tpu_custom_call.1']
    #allocation17 [shape = 'u8[32768]{0}', space=vmem, size = 0x8000, scoped, tag = 'input window, operand 4, single buffered']
    #allocation18 [shape = 'u8[1024]{0}', space=vmem, size = 0x400, scoped, tag = 'input window, operand 5, single buffered']
    #allocation19 [shape = 's32[1]{0}', space=sflag, size = 0x4, scoped, tag = 'scoped memory for tpu_custom_call.1']
    #allocation20 [shape = 'u8[512]{0}', space=vmem, size = 0x400, scoped, tag = 'input window, operand 6, single buffered']
    #allocation21 [shape = 'u8[8192]{0}', space=vmem, size = 0x2000, scoped, tag = 'input window, operand 7, single buffered']
    #allocation22 [shape = 's32[1]{0}', space=sflag, size = 0x4, scoped, tag = 'scoped memory for tpu_custom_call.1']
    #allocation23 [shape = 'u8[512]{0}', space=vmem, size = 0x400, scoped, tag = 'input window, operand 8, single buffered']
    #allocation24 [shape = 'u8[32768]{0}', space=vmem, size = 0x8000, scoped, tag = 'input window, operand 9, single buffered']
    #allocation25 [shape = 's32[1]{0}', space=sflag, size = 0x4, scoped, tag = 'scoped memory for tpu_custom_call.1']
    #allocation26 [shape = 'u8[8192]{0}', space=vmem, size = 0x2000, scoped, tag = 'output window, operand 0']
    %15 = vsyncpa [#allocation10], 0
    %s16 = scalar_lea.sflag [#allocation10], 1
    %17 = vsyncpa %s16, 0
    %18 = vsyncpa [#allocation13], 0
    %19 = vsyncpa [#allocation16], 0
    %20 = vsyncpa [#allocation19], 0
    %21 = vsyncpa [#allocation22], 0
    %22 = vsyncpa [#allocation25], 0
    %23 = vsyncpa [#allocation11], 0
    %s24 = scalar_lea.sflag [#allocation11], 1
    %25 = vsyncpa %s24, 0
    loop: start=0, step=1, limit=34
    $region2: #{tpu_custom_call.1} parent=1 // loop_pre_header
      _
    $region3: #{tpu_custom_call.1} parent=1 // loop_header
      %s27 = sphi 0, %s31
      %p28 = scmp.ge.s32.totalorder %s27, 34
      %s34 = sphi 0, %s46
      %s35 = sphi 0, %s42
      %s36 = sphi 0, %s34
      %s37 = sphi 0, %s35
      %s38 = sphi 0, %s36
      %s39 = sphi 0, %s37
      %s51 = sphi 0, %s53
      %s54 = sphi 0, %s51
      %s55 = sphi 0, %s54
      %s71 = sphi 0, %s55
      %s75 = sphi 0, %s75
      %s77 = sphi 0, %s75
      %s78 = sphi 0, %s77
      %s92 = sphi 0, %s78
      %s96 = sphi 0, %s96
      %s98 = sphi 0, %s96
      %s99 = sphi 0, %s98
      %s113 = sphi 0, %s99
      %s117 = sphi 0, %s117
      %s119 = sphi 0, %s117
      %s120 = sphi 0, %s119
      %s134 = sphi 0, %s120
      %s138 = sphi 0, %s138
      %s140 = sphi 0, %s138
      %s141 = sphi 0, %s140
      %s155 = sphi 0, %s141
      %s159 = sphi 0, %s159
      %s161 = sphi 0, %s159
      %s162 = sphi 0, %s161
      %s176 = sphi 0, %s162
      %s180 = sphi 0, %s180
      %s182 = sphi 0, %s180
      %s183 = sphi 0, %s182
      %s197 = sphi 0, %s183
      %s201 = sphi 0, %s201
      %s203 = sphi 0, %s201
      %s204 = sphi 0, %s203
      %s218 = sphi 0, %s204
      %s222 = sphi 0, %s222
      %s224 = sphi 0, %s222
      %s225 = sphi 0, %s224
      %s239 = sphi 0, %s225
      %s243 = sphi 0, %s243
      %s245 = sphi 0, %s243
      %s246 = sphi 0, %s245
      %s260 = sphi 0, %s246
      %s268 = sphi 0, %s270
      %s271 = sphi 0, %s268
      %s272 = sphi 0, %s271
      %s288 = sphi 0, %s272
    $region4: #{tpu_custom_call.1} parent=1 // loop_header_branch
      %30 = sbr.rel (%p28) target = $region8
    $region5: #{tpu_custom_call.1} parent=1 // loop_body
      %s32 = ssub.s32 %s27, 1
      %s33 = ssub.s32 %s27, 2
      %s40 = sadd.s32 1, %s35
      %p41 = scmp.ge.s32.totalorder %s40, 2
      %s42 = scalar_select %p41, 0, %s40
      %s43 = sadd.s32 1, %s34
      %s44 = scalar_select %p41, %s43, %s34
      %p45 = scmp.ge.s32.totalorder %s44, 16
      %s46 = scalar_select %p45, 0, %s44
      %s47 = ssub.s32 %s34, %s46
      %s48 = ssub.s32 %s35, %s42
      %s49 = sor.u32 %s47, %s48
      %p50 = scmp.eq.s32.totalorder %s49, 0
      %s52 = sadd.s32 %s51, 1
      %s53 = scalar_select %p50, %s51, %s52
      %p56 = pneg %p50
      %p57 = scmp.eq.s32.totalorder %s27, 31
      %p58 = por %p56, %p57
      %p59 = scmp.ne.s32.totalorder %s51, %s54
      %p60 = scmp.eq.s32.totalorder %s27, 0
      %p61 = por %p59, %p60
      %p62 = scmp.ne.s32.totalorder %s51, %s54
      %p63 = scmp.eq.s32.totalorder %s32, 31
      %p64 = por %p62, %p63
      %p65 = scmp.ne.s32.totalorder %s54, %s55
      %p66 = scmp.eq.s32.totalorder %s32, 0
      %p67 = por %p65, %p66
      %p68 = scmp.ne.s32.totalorder %s54, %s55
      %p69 = scmp.eq.s32.totalorder %s33, 31
      %p70 = por %p68, %p69
      %p72 = scmp.ne.s32.totalorder %s55, %s71
      %p73 = scmp.eq.s32.totalorder %s33, 0
      %p74 = por %p72, %p73
      %s76 = sadd.s32 %s75, 1
      %p79 = scmp.eq.s32.totalorder %s27, 31
      %p80 = scmp.ne.s32.totalorder %s75, %s77
      %p81 = scmp.eq.s32.totalorder %s27, 0
      %p82 = por %p80, %p81
      %p83 = scmp.ne.s32.totalorder %s75, %s77
      %p84 = scmp.eq.s32.totalorder %s32, 31
      %p85 = por %p83, %p84
      %p86 = scmp.ne.s32.totalorder %s77, %s78
      %p87 = scmp.eq.s32.totalorder %s32, 0
      %p88 = por %p86, %p87
      %p89 = scmp.ne.s32.totalorder %s77, %s78
      %p90 = scmp.eq.s32.totalorder %s33, 31
      %p91 = por %p89, %p90
      %p93 = scmp.ne.s32.totalorder %s78, %s92
      %p94 = scmp.eq.s32.totalorder %s33, 0
      %p95 = por %p93, %p94
      %s97 = sadd.s32 %s96, 1
      %p100 = scmp.eq.s32.totalorder %s27, 31
      %p101 = scmp.ne.s32.totalorder %s96, %s98
      %p102 = scmp.eq.s32.totalorder %s27, 0
      %p103 = por %p101, %p102
      %p104 = scmp.ne.s32.totalorder %s96, %s98
      %p105 = scmp.eq.s32.totalorder %s32, 31
      %p106 = por %p104, %p105
      %p107 = scmp.ne.s32.totalorder %s98, %s99
      %p108 = scmp.eq.s32.totalorder %s32, 0
      %p109 = por %p107, %p108
      %p110 = scmp.ne.s32.totalorder %s98, %s99
      %p111 = scmp.eq.s32.totalorder %s33, 31
      %p112 = por %p110, %p111
      %p114 = scmp.ne.s32.totalorder %s99, %s113
      %p115 = scmp.eq.s32.totalorder %s33, 0
      %p116 = por %p114, %p115
      %s118 = sadd.s32 %s117, 1
      %p121 = scmp.eq.s32.totalorder %s27, 31
      %p122 = scmp.ne.s32.totalorder %s117, %s119
      %p123 = scmp.eq.s32.totalorder %s27, 0
      %p124 = por %p122, %p123
      %p125 = scmp.ne.s32.totalorder %s117, %s119
      %p126 = scmp.eq.s32.totalorder %s32, 31
      %p127 = por %p125, %p126
      %p128 = scmp.ne.s32.totalorder %s119, %s120
      %p129 = scmp.eq.s32.totalorder %s32, 0
      %p130 = por %p128, %p129
      %p131 = scmp.ne.s32.totalorder %s119, %s120
      %p132 = scmp.eq.s32.totalorder %s33, 31
      %p133 = por %p131, %p132
      %p135 = scmp.ne.s32.totalorder %s120, %s134
      %p136 = scmp.eq.s32.totalorder %s33, 0
      %p137 = por %p135, %p136
      %s139 = sadd.s32 %s138, 1
      %p142 = scmp.eq.s32.totalorder %s27, 31
      %p143 = scmp.ne.s32.totalorder %s138, %s140
      %p144 = scmp.eq.s32.totalorder %s27, 0
      %p145 = por %p143, %p144
      %p146 = scmp.ne.s32.totalorder %s138, %s140
      %p147 = scmp.eq.s32.totalorder %s32, 31
      %p148 = por %p146, %p147
      %p149 = scmp.ne.s32.totalorder %s140, %s141
      %p150 = scmp.eq.s32.totalorder %s32, 0
      %p151 = por %p149, %p150
      %p152 = scmp.ne.s32.totalorder %s140, %s141
      %p153 = scmp.eq.s32.totalorder %s33, 31
      %p154 = por %p152, %p153
      %p156 = scmp.ne.s32.totalorder %s141, %s155
      %p157 = scmp.eq.s32.totalorder %s33, 0
      %p158 = por %p156, %p157
      %s160 = sadd.s32 %s159, 1
      %p163 = scmp.eq.s32.totalorder %s27, 31
      %p164 = scmp.ne.s32.totalorder %s159, %s161
      %p165 = scmp.eq.s32.totalorder %s27, 0
      %p166 = por %p164, %p165
      %p167 = scmp.ne.s32.totalorder %s159, %s161
      %p168 = scmp.eq.s32.totalorder %s32, 31
      %p169 = por %p167, %p168
      %p170 = scmp.ne.s32.totalorder %s161, %s162
      %p171 = scmp.eq.s32.totalorder %s32, 0
      %p172 = por %p170, %p171
      %p173 = scmp.ne.s32.totalorder %s161, %s162
      %p174 = scmp.eq.s32.totalorder %s33, 31
      %p175 = por %p173, %p174
      %p177 = scmp.ne.s32.totalorder %s162, %s176
      %p178 = scmp.eq.s32.totalorder %s33, 0
      %p179 = por %p177, %p178
      %s181 = sadd.s32 %s180, 1
      %p184 = scmp.eq.s32.totalorder %s27, 31
      %p185 = scmp.ne.s32.totalorder %s180, %s182
      %p186 = scmp.eq.s32.totalorder %s27, 0
      %p187 = por %p185, %p186
      %p188 = scmp.ne.s32.totalorder %s180, %s182
      %p189 = scmp.eq.s32.totalorder %s32, 31
      %p190 = por %p188, %p189
      %p191 = scmp.ne.s32.totalorder %s182, %s183
      %p192 = scmp.eq.s32.totalorder %s32, 0
      %p193 = por %p191, %p192
      %p194 = scmp.ne.s32.totalorder %s182, %s183
      %p195 = scmp.eq.s32.totalorder %s33, 31
      %p196 = por %p194, %p195
      %p198 = scmp.ne.s32.totalorder %s183, %s197
      %p199 = scmp.eq.s32.totalorder %s33, 0
      %p200 = por %p198, %p199
      %s202 = sadd.s32 %s201, 1
      %p205 = scmp.eq.s32.totalorder %s27, 31
      %p206 = scmp.ne.s32.totalorder %s201, %s203
      %p207 = scmp.eq.s32.totalorder %s27, 0
      %p208 = por %p206, %p207
      %p209 = scmp.ne.s32.totalorder %s201, %s203
      %p210 = scmp.eq.s32.totalorder %s32, 31
      %p211 = por %p209, %p210
      %p212 = scmp.ne.s32.totalorder %s203, %s204
      %p213 = scmp.eq.s32.totalorder %s32, 0
      %p214 = por %p212, %p213
      %p215 = scmp.ne.s32.totalorder %s203, %s204
      %p216 = scmp.eq.s32.totalorder %s33, 31
      %p217 = por %p215, %p216
      %p219 = scmp.ne.s32.totalorder %s204, %s218
      %p220 = scmp.eq.s32.totalorder %s33, 0
      %p221 = por %p219, %p220
      %s223 = sadd.s32 %s222, 1
      %p226 = scmp.eq.s32.totalorder %s27, 31
      %p227 = scmp.ne.s32.totalorder %s222, %s224
      %p228 = scmp.eq.s32.totalorder %s27, 0
      %p229 = por %p227, %p228
      %p230 = scmp.ne.s32.totalorder %s222, %s224
      %p231 = scmp.eq.s32.totalorder %s32, 31
      %p232 = por %p230, %p231
      %p233 = scmp.ne.s32.totalorder %s224, %s225
      %p234 = scmp.eq.s32.totalorder %s32, 0
      %p235 = por %p233, %p234
      %p236 = scmp.ne.s32.totalorder %s224, %s225
      %p237 = scmp.eq.s32.totalorder %s33, 31
      %p238 = por %p236, %p237
      %p240 = scmp.ne.s32.totalorder %s225, %s239
      %p241 = scmp.eq.s32.totalorder %s33, 0
      %p242 = por %p240, %p241
      %s244 = sadd.s32 %s243, 1
      %p247 = scmp.eq.s32.totalorder %s27, 31
      %p248 = scmp.ne.s32.totalorder %s243, %s245
      %p249 = scmp.eq.s32.totalorder %s27, 0
      %p250 = por %p248, %p249
      %p251 = scmp.ne.s32.totalorder %s243, %s245
      %p252 = scmp.eq.s32.totalorder %s32, 31
      %p253 = por %p251, %p252
      %p254 = scmp.ne.s32.totalorder %s245, %s246
      %p255 = scmp.eq.s32.totalorder %s32, 0
      %p256 = por %p254, %p255
      %p257 = scmp.ne.s32.totalorder %s245, %s246
      %p258 = scmp.eq.s32.totalorder %s33, 31
      %p259 = por %p257, %p258
      %p261 = scmp.ne.s32.totalorder %s246, %s260
      %p262 = scmp.eq.s32.totalorder %s33, 0
      %p263 = por %p261, %p262
      %s264 = ssub.s32 %s34, %s46
      %s265 = ssub.s32 %s35, %s42
      %s266 = sor.u32 %s264, %s265
      %p267 = scmp.eq.s32.totalorder %s266, 0
      %s269 = sadd.s32 %s268, 1
      %s270 = scalar_select %p267, %s268, %s269
      %p273 = pneg %p267
      %p274 = scmp.eq.s32.totalorder %s27, 31
      %p275 = por %p273, %p274
      %p276 = scmp.ne.s32.totalorder %s268, %s271
      %p277 = scmp.eq.s32.totalorder %s27, 0
      %p278 = por %p276, %p277
      %p279 = scmp.ne.s32.totalorder %s268, %s271
      %p280 = scmp.eq.s32.totalorder %s32, 31
      %p281 = por %p279, %p280
      %p282 = scmp.ne.s32.totalorder %s271, %s272
      %p283 = scmp.eq.s32.totalorder %s32, 0
      %p284 = por %p282, %p283
      %p285 = scmp.ne.s32.totalorder %s271, %s272
      %p286 = scmp.eq.s32.totalorder %s33, 31
      %p287 = por %p285, %p286
      %p289 = scmp.ne.s32.totalorder %s272, %s288
      %p290 = scmp.eq.s32.totalorder %s33, 0
      %p291 = por %p289, %p290
      %p292 = scmp.le.s32.totalorder 1, %s27
      %p293 = scmp.lt.s32.totalorder %s27, 33
      %p294 = pnand %p292, %p293
      %p295 = pneg %p294
      // Predicated region
      $region9: #{tpu_custom_call.1} parent=5 // pred_check
        _
      $region10: #{tpu_custom_call.1} parent=5 // pred_check_branch
        %297 = sbr.rel (%p294) target = $region12
      $region11: #{tpu_custom_call.1} parent=5 // pred_region
        %s298 = ssub.s32 %s27, 1
        // Predicated region
        $region13: #{tpu_custom_call.1} parent=11 // pred_check
          %p299 = pneg %p88
        $region14: #{tpu_custom_call.1} parent=11 // pred_check_branch
          %301 = sbr.rel (%p299) target = $region16
        $region15: #{tpu_custom_call.1} parent=11 // pred_region
          %s303 = ssub.s32 512, 512
          %304 = vsyncadd [#allocation13], %s303
          %s305 = sshll.u32 [#allocation12], 4
          %s306 = int_to_ptr.vmem [resolvable:$true] %s305
          %311 = dma.hbm_to_vmem [thread:$0]  %s1, 512, %s306, [#allocation13], 128, 128, 8
        $region16: #{tpu_custom_call.1} parent=11 // pred_fallthru
          _
        // Predicated region
        $region17: #{tpu_custom_call.1} parent=11 // pred_check
          %p312 = pneg %p109
        $region18: #{tpu_custom_call.1} parent=11 // pred_check_branch
          %314 = sbr.rel (%p312) target = $region20
        $region19: #{tpu_custom_call.1} parent=11 // pred_region
          %s316 = ssub.s32 64, 64
          %317 = vsyncadd [#allocation13], %s316
          %s319 = sshll.u32 [#allocation14], 4
          %s320 = int_to_ptr.vmem [resolvable:$true] %s319
          %322 = dma.hbm_to_vmem [thread:$0]  %s2, 64, %s320, [#allocation13]
        $region20: #{tpu_custom_call.1} parent=11 // pred_fallthru
          _
        // Predicated region
        $region21: #{tpu_custom_call.1} parent=11 // pred_check
          %p323 = pneg %p130
        $region22: #{tpu_custom_call.1} parent=11 // pred_check_branch
          %325 = sbr.rel (%p323) target = $region24
        $region23: #{tpu_custom_call.1} parent=11 // pred_region
          %s327 = ssub.s32 16, 16
          %328 = vsyncadd [#allocation16], %s327
          %s330 = sshll.u32 [#allocation15], 4
          %s331 = int_to_ptr.vmem [resolvable:$true] %s330
          %333 = dma.hbm_to_vmem [thread:$0]  %s3, 16, %s331, [#allocation16]
        $region24: #{tpu_custom_call.1} parent=11 // pred_fallthru
          _
        // Predicated region
        $region25: #{tpu_custom_call.1} parent=11 // pred_check
          %p334 = pneg %p151
        $region26: #{tpu_custom_call.1} parent=11 // pred_check_branch
          %336 = sbr.rel (%p334) target = $region28
        $region27: #{tpu_custom_call.1} parent=11 // pred_region
          %s338 = ssub.s32 1024, 1024
          %339 = vsyncadd [#allocation16], %s338
          %s340 = sshll.u32 [#allocation17], 4
          %s341 = int_to_ptr.vmem [resolvable:$true] %s340
          %346 = dma.hbm_to_vmem [thread:$0]  %s4, 1024, %s341, [#allocation16], 128, 128, 8
        $region28: #{tpu_custom_call.1} parent=11 // pred_fallthru
          _
        // Predicated region
        $region29: #{tpu_custom_call.1} parent=11 // pred_check
          %p347 = pneg %p172
        $region30: #{tpu_custom_call.1} parent=11 // pred_check_branch
          %349 = sbr.rel (%p347) target = $region32
        $region31: #{tpu_custom_call.1} parent=11 // pred_region
          %s351 = ssub.s32 32, 32
          %352 = vsyncadd [#allocation19], %s351
          %s354 = sshll.u32 [#allocation18], 4
          %s355 = int_to_ptr.vmem [resolvable:$true] %s354
          %357 = dma.hbm_to_vmem [thread:$0]  %s5, 32, %s355, [#allocation19]
        $region32: #{tpu_custom_call.1} parent=11 // pred_fallthru
          _
        // Predicated region
        $region33: #{tpu_custom_call.1} parent=11 // pred_check
          %p358 = pneg %p193
        $region34: #{tpu_custom_call.1} parent=11 // pred_check_branch
          %360 = sbr.rel (%p358) target = $region36
        $region35: #{tpu_custom_call.1} parent=11 // pred_region
          %s362 = ssub.s32 16, 16
          %363 = vsyncadd [#allocation19], %s362
          %s365 = sshll.u32 [#allocation20], 4
          %s366 = int_to_ptr.vmem [resolvable:$true] %s365
          %368 = dma.hbm_to_vmem [thread:$0]  %s6, 16, %s366, [#allocation19]
        $region36: #{tpu_custom_call.1} parent=11 // pred_fallthru
          _
        // Predicated region
        $region37: #{tpu_custom_call.1} parent=11 // pred_check
          %p369 = pneg %p214
        $region38: #{tpu_custom_call.1} parent=11 // pred_check_branch
          %371 = sbr.rel (%p369) target = $region40
        $region39: #{tpu_custom_call.1} parent=11 // pred_region
          %s373 = ssub.s32 256, 256
          %374 = vsyncadd [#allocation22], %s373
          %s375 = sshll.u32 [#allocation21], 4
          %s376 = int_to_ptr.vmem [resolvable:$true] %s375
          %381 = dma.hbm_to_vmem [thread:$0]  %s7, 256, %s376, [#allocation22], 128, 128, 8
        $region40: #{tpu_custom_call.1} parent=11 // pred_fallthru
          _
        // Predicated region
        $region41: #{tpu_custom_call.1} parent=11 // pred_check
          %p382 = pneg %p235
        $region42: #{tpu_custom_call.1} parent=11 // pred_check_branch
          %384 = sbr.rel (%p382) target = $region44
        $region43: #{tpu_custom_call.1} parent=11 // pred_region
          %s386 = ssub.s32 16, 16
          %387 = vsyncadd [#allocation22], %s386
          %s389 = sshll.u32 [#allocation23], 4
          %s390 = int_to_ptr.vmem [resolvable:$true] %s389
          %392 = dma.hbm_to_vmem [thread:$0]  %s8, 16, %s390, [#allocation22]
        $region44: #{tpu_custom_call.1} parent=11 // pred_fallthru
          _
        // Predicated region
        $region45: #{tpu_custom_call.1} parent=11 // pred_check
          %p393 = pneg %p256
        $region46: #{tpu_custom_call.1} parent=11 // pred_check_branch
          %395 = sbr.rel (%p393) target = $region48
        $region47: #{tpu_custom_call.1} parent=11 // pred_region
          %s397 = ssub.s32 1024, 1024
          %398 = vsyncadd [#allocation25], %s397
          %s399 = sshll.u32 [#allocation24], 4
          %s400 = int_to_ptr.vmem [resolvable:$true] %s399
          %405 = dma.hbm_to_vmem [thread:$0]  %s9, 1024, %s400, [#allocation25], 128, 128, 8
        $region48: #{tpu_custom_call.1} parent=11 // pred_fallthru
          _
      $region12: #{tpu_custom_call.1} parent=5 // pred_fallthru
        _
      %p406 = scmp.lt.s32.totalorder %s27, 32
      // Predicated region
      $region49: #{tpu_custom_call.1} parent=5 // pred_check
        %p407 = pneg %p406
      $region50: #{tpu_custom_call.1} parent=5 // pred_check_branch
        %409 = sbr.rel (%p407) target = $region52
      $region51: #{tpu_custom_call.1} parent=5 // pred_region
        // Predicated region
        $region53: #{tpu_custom_call.1} parent=51 // pred_check
          %p410 = pneg %p61
        $region54: #{tpu_custom_call.1} parent=51 // pred_check_branch
          %412 = sbr.rel (%p410) target = $region56
        $region55: #{tpu_custom_call.1} parent=51 // pred_region
          %s413 = sand.u32 %s51, 1
          %s414 = scalar_lea.sflag [#allocation10], %s413
          %s415 = sand.u32 %s51, 1
          %s416 = smul.addr %s415, 8
          %s417 = scalar_lea.vmem [#allocation9], %s416
          %s419 = ssub.s32 128, 128
          %420 = vsyncadd %s414, %s419
          %s421 = smul.addr %s34, 2
          %s422 = sadd.s32 %s35, %s421
          %s423 = smul.addr %s422, 128
          %s424 = scalar_lea.hbm %s0, %s423
          %s426 = sshll.u32 %s417, 4
          %s427 = int_to_ptr.vmem [resolvable:$true] %s426
          %429 = dma.hbm_to_vmem [thread:$0]  %s424, 128, %s427, %s414
        $region56: #{tpu_custom_call.1} parent=51 // pred_fallthru
          _
      $region52: #{tpu_custom_call.1} parent=5 // pred_fallthru
        _
      %p430 = scmp.le.s32.totalorder 1, %s27
      %p431 = scmp.lt.s32.totalorder %s27, 33
      %p432 = pnand %p430, %p431
      %p433 = pneg %p432
      // Predicated region
      $region57: #{tpu_custom_call.1} parent=5 // pred_check
        _
      $region58: #{tpu_custom_call.1} parent=5 // pred_check_branch
        %435 = sbr.rel (%p432) target = $region60
      $region59: #{tpu_custom_call.1} parent=5 // pred_region
        %s436 = ssub.s32 %s27, 1
        %s437 = sand.u32 %s54, 1
        %s438 = scalar_lea.sflag [#allocation10], %s437
        %s439 = sand.u32 %s54, 1
        %s440 = smul.addr %s439, 8
        %s441 = scalar_lea.vmem [#allocation9], %s440
        // Predicated region
        $region61: #{tpu_custom_call.1} parent=59 // pred_check
          %p442 = pneg %p67
        $region62: #{tpu_custom_call.1} parent=59 // pred_check_branch
          %444 = sbr.rel (%p442) target = $region64
        $region63: #{tpu_custom_call.1} parent=59 // pred_region
          %445 = dma.done %s438, 128
        $region64: #{tpu_custom_call.1} parent=59 // pred_fallthru
          _
        // Predicated region
        $region65: #{tpu_custom_call.1} parent=59 // pred_check
          %p446 = pneg %p88
        $region66: #{tpu_custom_call.1} parent=59 // pred_check_branch
          %448 = sbr.rel (%p446) target = $region68
        $region67: #{tpu_custom_call.1} parent=59 // pred_region
          %449 = dma.done [#allocation13], 512
        $region68: #{tpu_custom_call.1} parent=59 // pred_fallthru
          _
        // Predicated region
        $region69: #{tpu_custom_call.1} parent=59 // pred_check
          %p450 = pneg %p109
        $region70: #{tpu_custom_call.1} parent=59 // pred_check_branch
          %452 = sbr.rel (%p450) target = $region72
        $region71: #{tpu_custom_call.1} parent=59 // pred_region
          %453 = dma.done [#allocation13], 64
        $region72: #{tpu_custom_call.1} parent=59 // pred_fallthru
          _
        // Predicated region
        $region73: #{tpu_custom_call.1} parent=59 // pred_check
          %p454 = pneg %p130
        $region74: #{tpu_custom_call.1} parent=59 // pred_check_branch
          %456 = sbr.rel (%p454) target = $region76
        $region75: #{tpu_custom_call.1} parent=59 // pred_region
          %457 = dma.done [#allocation16], 16
        $region76: #{tpu_custom_call.1} parent=59 // pred_fallthru
          _
        // Predicated region
        $region77: #{tpu_custom_call.1} parent=59 // pred_check
          %p458 = pneg %p151
        $region78: #{tpu_custom_call.1} parent=59 // pred_check_branch
          %460 = sbr.rel (%p458) target = $region80
        $region79: #{tpu_custom_call.1} parent=59 // pred_region
          %461 = dma.done [#allocation16], 1024
        $region80: #{tpu_custom_call.1} parent=59 // pred_fallthru
          _
        // Predicated region
        $region81: #{tpu_custom_call.1} parent=59 // pred_check
          %p462 = pneg %p172
        $region82: #{tpu_custom_call.1} parent=59 // pred_check_branch
          %464 = sbr.rel (%p462) target = $region84
        $region83: #{tpu_custom_call.1} parent=59 // pred_region
          %465 = dma.done [#allocation19], 32
        $region84: #{tpu_custom_call.1} parent=59 // pred_fallthru
          _
        // Predicated region
        $region85: #{tpu_custom_call.1} parent=59 // pred_check
          %p466 = pneg %p193
        $region86: #{tpu_custom_call.1} parent=59 // pred_check_branch
          %468 = sbr.rel (%p466) target = $region88
        $region87: #{tpu_custom_call.1} parent=59 // pred_region
          %469 = dma.done [#allocation19], 16
        $region88: #{tpu_custom_call.1} parent=59 // pred_fallthru
          _
        // Predicated region
        $region89: #{tpu_custom_call.1} parent=59 // pred_check
          %p470 = pneg %p214
        $region90: #{tpu_custom_call.1} parent=59 // pred_check_branch
          %472 = sbr.rel (%p470) target = $region92
        $region91: #{tpu_custom_call.1} parent=59 // pred_region
          %473 = dma.done [#allocation22], 256
        $region92: #{tpu_custom_call.1} parent=59 // pred_fallthru
          _
        // Predicated region
        $region93: #{tpu_custom_call.1} parent=59 // pred_check
          %p474 = pneg %p235
        $region94: #{tpu_custom_call.1} parent=59 // pred_check_branch
          %476 = sbr.rel (%p474) target = $region96
        $region95: #{tpu_custom_call.1} parent=59 // pred_region
          %477 = dma.done [#allocation22], 16
        $region96: #{tpu_custom_call.1} parent=59 // pred_fallthru
          _
        // Predicated region
        $region97: #{tpu_custom_call.1} parent=59 // pred_check
          %p478 = pneg %p256
        $region98: #{tpu_custom_call.1} parent=59 // pred_check_branch
          %480 = sbr.rel (%p478) target = $region100
        $region99: #{tpu_custom_call.1} parent=59 // pred_region
          %481 = dma.done [#allocation25], 1024
        $region100: #{tpu_custom_call.1} parent=59 // pred_fallthru
          _
        %s482 = sand.u32 %s54, 1
        %s483 = scalar_lea.sflag [#allocation10], %s482
        %s484 = sand.u32 %s54, 1
        %s485 = smul.addr %s484, 8
        %s486 = scalar_lea.vmem [#allocation9], %s485
        %p487 = pneg %p67
        %p488 = pneg %p64
        %p489 = pneg %p88
        %p490 = pneg %p85
        %p491 = pneg %p109
        %p492 = pneg %p106
        %p493 = pneg %p130
        %p494 = pneg %p127
        %p495 = pneg %p151
        %p496 = pneg %p148
        %p497 = pneg %p172
        %p498 = pneg %p169
        %p499 = pneg %p193
        %p500 = pneg %p190
        %p501 = pneg %p214
        %p502 = pneg %p211
        %p503 = pneg %p235
        %p504 = pneg %p232
        %p505 = pneg %p256
        %p506 = pneg %p253
        %p507 = pneg %p284
        %p508 = pneg %p281
        %s509 = sand.u32 %s271, 1
        %s510 = scalar_lea.sflag [#allocation11], %s509
        %s511 = sand.u32 %s271, 1
        %s512 = smul.addr %s511, 8
        %s513 = scalar_lea.vmem [#allocation26], %s512
        %p514 = scmp.eq.s32.totalorder %s37, 0
        // Predicated region
        $region101: #{tpu_custom_call.1} parent=59 // pred_check
          %p515 = pneg %p514
        $region102: #{tpu_custom_call.1} parent=59 // pred_check_branch
          %517 = sbr.rel (%p515) target = $region104
        $region103: #{tpu_custom_call.1} parent=59 // pred_region
          %vm518 = vcmask 523264
          %519 = vst.msk [vmem:[#allocation2] sm:$0xff] %vm518, 0.0
          %520 = vst.msk [vmem:[#allocation2 + $0x8] sm:$0xff] %vm518, 0.0
          %521 = vst.msk [vmem:[#allocation3] sm:$0xff] %vm518, 0.0
          %vm522 = vcmask 518144
          %523 = vst.msk [vmem:[#allocation3 + $0x8] sm:$0x7] %vm522, 0.0
        $region104: #{tpu_custom_call.1} parent=59 // pred_fallthru
          _
        %v524 = vld [vmem:[%s441] sm:$0xff]
        %v525 = vld [vmem:[#allocation12] sm:$0xff]
        %v526 = vld [vmem:[#allocation12 + $0x8] sm:$0xff]
        %v527 = vld [vmem:[#allocation12 + $0x10] sm:$0xff]
        %v528 = vld [vmem:[#allocation12 + $0x18] sm:$0xff]
        %vm529 = vcmask 261120
        %v531 = vsel %vm529, %v524, 0
        %533 = vmatprep.subr.mxu0 0.0
        %534 = vmatpush1.msra.mxu0 %v525
        %535 = vmatprep.subr.mxu0 0.0
        %536 = vmatpush1.msra.mxu0 %v526
        %537 = vmatprep.subr.mxu0 0.0
        %538 = vmatpush1.msra.mxu0 %v527
        %539 = vmatprep.subr.mxu0 0.0
        %540 = vmatpush1.msra.mxu0 %v528
        %541 = vmatprep.subr.mxu0 0.0
        %542 = vmatpush1.msra.mxu0 0.0
        %543 = vmatprep.subr.mxu0 0.0
        %544 = vmatpush1.msra.mxu0 0.0
        %545 = vmatprep.subr.mxu0 0.0
        %546 = vmatpush1.msra.mxu0 0.0
        %547 = vmatprep.subr.mxu0 0.0
        %548 = vmatpush1.msra.mxu0 0.0
        %549 = vmatprep.subr.mxu0 0.0
        %550 = vmatpush1.msra.mxu0 0.0
        %551 = vmatprep.subr.mxu0 0.0
        %552 = vmatpush1.msra.mxu0 0.0
        %553 = vmatprep.subr.mxu0 0.0
        %554 = vmatpush1.msra.mxu0 0.0
        %555 = vmatprep.subr.mxu0 0.0
        %556 = vmatpush1.msra.mxu0 0.0
        %557 = vmatprep.subr.mxu0 0.0
        %558 = vmatpush1.msra.mxu0 0.0
        %559 = vmatprep.subr.mxu0 0.0
        %560 = vmatpush1.msra.mxu0 0.0
        %561 = vmatprep.subr.mxu0 0.0
        %562 = vmatpush1.msra.mxu0 0.0
        %563 = vmatprep.subr.mxu0 0.0
        %564 = vmatpush1.msra.mxu0 0.0
        %565 = vmatprep.subr.mxu0 0.0
        %566 = vmatpush1.msra.mxu0 0.0
        %567 = vmatprep.subr.mxu0 0.0
        %568 = vmatpush1.msra.mxu0 0.0
        %569 = vmatprep.subr.mxu0 0.0
        %570 = vmatpush1.msra.mxu0 0.0
        %571 = vmatprep.subr.mxu0 0.0
        %572 = vmatpush1.msra.mxu0 0.0
        %573 = vmatprep.subr.mxu0 0.0
        %574 = vmatpush1.msra.mxu0 0.0
        %575 = vmatprep.subr.mxu0 0.0
        %576 = vmatpush1.msra.mxu0 0.0
        %577 = vmatprep.subr.mxu0 0.0
        %578 = vmatpush1.msra.mxu0 0.0
        %579 = vmatprep.subr.mxu0 0.0
        %580 = vmatpush1.msra.mxu0 0.0
        %581 = vmatprep.subr.mxu0 0.0
        %582 = vmatpush1.msra.mxu0 0.0
        %583 = vmatprep.subr.mxu0 0.0
        %584 = vmatpush1.msra.mxu0 0.0
        %585 = vmatprep.subr.mxu0 0.0
        %586 = vmatpush1.msra.mxu0 0.0
        %587 = vmatprep.subr.mxu0 0.0
        %588 = vmatpush1.msra.mxu0 0.0
        %589 = vmatprep.subr.mxu0 0.0
        %590 = vmatpush1.msra.mxu0 0.0
        %591 = vmatprep.subr.mxu0 0.0
        %592 = vmatpush1.msra.mxu0 0.0
        %593 = vmatprep.subr.mxu0 0.0
        %594 = vmatpush1.msra.mxu0 0.0
        %595 = vmatprep.subr.mxu0 0.0
        %596 = vmatpush1.msra.mxu0 0.0
        %597 = vmatprep.mubr.f32.mxu0 0.0
        %598 = vmatmul.mubr.f32.gmra.mrb[0].mxu0 %v531
        %v599 = vpop.f32.mrb[0].mxu0
        %v600 = vadd.f32 0.0, %v599
        %v601 = vpop.f32.mrb[0].mxu0
        %602 = vdwg.mxu0
        %vm603 = vcmask 523264
        %604 = vst.msk [vmem:[#allocation3 + $0x3] sm:$0xff] %vm603, %v600
        %v605 = vld [vmem:[#allocation14] sm:$0xf]
        %v606 = vld [vmem:[#allocation15] sm:$0x1]
        %v608 = vlaneseq
        %v609 = vshrl.u32 %v608, 7
        %v610 = vsub.s32 0, %v609
        %v611 = vrot.slane %v606, %v610
        %v613 = vld [vmem:[#allocation3] sm:$0xff]
        %v614 = vlaneseq
        %v615 = vshrl.u32 %v614, 7
        %v616 = vsub.s32 0, %v615
        %v617 = vrot.slane %v605, %v616
        %v618 = vmul.f32 %v613, %v617
        %v619 = vadd.f32 %v611, %v618
        %v620 = vld [vmem:[#allocation3 + $0x1] sm:$0xff]
        %v621 = vlaneseq
        %v622 = vshrl.u32 %v621, 7
        %v623 = vsub.s32 1, %v622
        %v624 = vrot.slane %v605, %v623
        %v625 = vmul.f32 %v620, %v624
        %v626 = vadd.f32 %v619, %v625
        %v627 = vld [vmem:[#allocation3 + $0x2] sm:$0xff]
        %v628 = vlaneseq
        %v629 = vshrl.u32 %v628, 7
        %v630 = vsub.s32 2, %v629
        %v631 = vrot.slane %v605, %v630
        %v632 = vmul.f32 %v627, %v631
        %v633 = vadd.f32 %v626, %v632
        %v634 = vld [vmem:[#allocation3 + $0x3] sm:$0xff]
        %v635 = vlaneseq
        %v636 = vshrl.u32 %v635, 7
        %v637 = vsub.s32 3, %v636
        %v638 = vrot.slane %v605, %v637
        %v639 = vmul.f32 %v634, %v638
        %v640 = vadd.f32 %v633, %v639
        %v641 = vxor.u32 %v640, 2147483648
        %v642 = vmul.f32 %v641, 1.442695
        %v643 = vpow.pop %v642
        %v644 = vadd.f32 %v643, 1.0
        %v645 = vrcp.pop %v644
        %v646 = vmul.f32 1.0, %v645
        %v647 = vmul.f32 %v640, %v646
        %648 = vst.msk [vmem:[#allocation5] sm:$0xff] %vm603, %v647
        %v649 = vld [vmem:[#allocation3 + $0x8] sm:$0x7]
        %vm650 = vcmask 518144
        %651 = vst.msk [vmem:[#allocation3] sm:$0x7] %vm650, %v649
        %v652 = vld [vmem:[#allocation17] sm:$0xff]
        %v653 = vld [vmem:[#allocation17 + $0x8] sm:$0xff]
        %v654 = vld [vmem:[#allocation17 + $0x10] sm:$0xff]
        %v655 = vld [vmem:[#allocation17 + $0x18] sm:$0xff]
        %v656 = vld [vmem:[#allocation17 + $0x20] sm:$0xff]
        %v657 = vld [vmem:[#allocation17 + $0x28] sm:$0xff]
        %v658 = vld [vmem:[#allocation17 + $0x30] sm:$0xff]
        %v659 = vld [vmem:[#allocation17 + $0x38] sm:$0xff]
        %v661 = vsel %vm603, %v647, 0
        %663 = vmatprep.subr.mxu0 0.0
        %664 = vmatpush1.msra.mxu0 %v652
        %665 = vmatprep.subr.mxu0 0.0
        %666 = vmatpush1.msra.mxu0 %v653
        %667 = vmatprep.subr.mxu0 0.0
        %668 = vmatpush1.msra.mxu0 %v654
        %669 = vmatprep.subr.mxu0 0.0
        %670 = vmatpush1.msra.mxu0 %v655
        %671 = vmatprep.subr.mxu0 0.0
        %672 = vmatpush1.msra.mxu0 %v656
        %673 = vmatprep.subr.mxu0 0.0
        %674 = vmatpush1.msra.mxu0 %v657
        %675 = vmatprep.subr.mxu0 0.0
        %676 = vmatpush1.msra.mxu0 %v658
        %677 = vmatprep.subr.mxu0 0.0
        %678 = vmatpush1.msra.mxu0 %v659
        %679 = vmatprep.subr.mxu0 0.0
        %680 = vmatpush1.msra.mxu0 0.0
        %681 = vmatprep.subr.mxu0 0.0
        %682 = vmatpush1.msra.mxu0 0.0
        %683 = vmatprep.subr.mxu0 0.0
        %684 = vmatpush1.msra.mxu0 0.0
        %685 = vmatprep.subr.mxu0 0.0
        %686 = vmatpush1.msra.mxu0 0.0
        %687 = vmatprep.subr.mxu0 0.0
        %688 = vmatpush1.msra.mxu0 0.0
        %689 = vmatprep.subr.mxu0 0.0
        %690 = vmatpush1.msra.mxu0 0.0
        %691 = vmatprep.subr.mxu0 0.0
        %692 = vmatpush1.msra.mxu0 0.0
        %693 = vmatprep.subr.mxu0 0.0
        %694 = vmatpush1.msra.mxu0 0.0
        %695 = vmatprep.subr.mxu0 0.0
        %696 = vmatpush1.msra.mxu0 0.0
        %697 = vmatprep.subr.mxu0 0.0
        %698 = vmatpush1.msra.mxu0 0.0
        %699 = vmatprep.subr.mxu0 0.0
        %700 = vmatpush1.msra.mxu0 0.0
        %701 = vmatprep.subr.mxu0 0.0
        %702 = vmatpush1.msra.mxu0 0.0
        %703 = vmatprep.subr.mxu0 0.0
        %704 = vmatpush1.msra.mxu0 0.0
        %705 = vmatprep.subr.mxu0 0.0
        %706 = vmatpush1.msra.mxu0 0.0
        %707 = vmatprep.subr.mxu0 0.0
        %708 = vmatpush1.msra.mxu0 0.0
        %709 = vmatprep.subr.mxu0 0.0
        %710 = vmatpush1.msra.mxu0 0.0
        %711 = vmatprep.subr.mxu0 0.0
        %712 = vmatpush1.msra.mxu0 0.0
        %713 = vmatprep.subr.mxu0 0.0
        %714 = vmatpush1.msra.mxu0 0.0
        %715 = vmatprep.subr.mxu0 0.0
        %716 = vmatpush1.msra.mxu0 0.0
        %717 = vmatprep.subr.mxu0 0.0
        %718 = vmatpush1.msra.mxu0 0.0
        %719 = vmatprep.subr.mxu0 0.0
        %720 = vmatpush1.msra.mxu0 0.0
        %721 = vmatprep.subr.mxu0 0.0
        %722 = vmatpush1.msra.mxu0 0.0
        %723 = vmatprep.subr.mxu0 0.0
        %724 = vmatpush1.msra.mxu0 0.0
        %725 = vmatprep.subr.mxu0 0.0
        %726 = vmatpush1.msra.mxu0 0.0
        %727 = vmatprep.mubr.f32.mxu0 0.0
        %728 = vmatmul.mubr.f32.gmra.mrb[0].mxu0 %v661
        %v729 = vpop.f32.mrb[0].mxu0
        %v730 = vadd.f32 0.0, %v729
        %v731 = vpop.f32.mrb[0].mxu0
        %732 = vdwg.mxu0
        %v733 = vld [vmem:[#allocation20] sm:$0x1]
        %v735 = vlaneseq
        %v736 = vshrl.u32 %v735, 7
        %v737 = vsub.s32 0, %v736
        %v738 = vrot.slane %v733, %v737
        %v740 = vld [vmem:[#allocation18] sm:$0x1]
        %742 = vset.pattern.permute.xlu0 0
        %743 = vperm.xlu0 %742, %v730
        %v744 = vpop.permute.xlu0 %743
        %v746 = vlaneseq
        %v747 = vshrl.u32 %v746, 7
        %v748 = vsub.s32 0, %v747
        %v749 = vrot.slane %v740, %v748
        %v750 = vmul.f32 %v744, %v749
        %v751 = vadd.f32 %v738, %v750
        %v752 = vld [vmem:[#allocation18 + $0x1] sm:$0x1]
        %753 = vset.pattern.permute.xlu0 1
        %754 = vperm.xlu0 %753, %v730
        %v755 = vpop.permute.xlu0 %754
        %v757 = vlaneseq
        %v758 = vshrl.u32 %v757, 7
        %v759 = vsub.s32 0, %v758
        %v760 = vrot.slane %v752, %v759
        %v761 = vmul.f32 %v755, %v760
        %v762 = vadd.f32 %v751, %v761
        %v763 = vmax.f32 %v762, 0.0
        %vm764 = vcmp.ne.f32.partialorder %v762, %v762
        %v765 = vadd.f32 %v762, 0.0
        %v766 = vand.u32 2147483647, %v762
        %v767 = vsub.f32 0.0, %v766
        %v768 = vmul.f32 %v767, 1.442695
        %v769 = vpow.pop %v768
        %v770 = vadd.f32 %v769, 1.0
        %v771 = vlog2.pop %v770
        %v772 = vmul.f32 %v771, 0.6931472
        %v773 = vmul.f32 -0.5, %v769
        %v774 = vadd.f32 %v773, 1.0
        %v775 = vmul.f32 %v774, %v769
        %v776 = vand.u32 2147483647, %v769
        %vm777 = vcmp.lt.f32.partialorder %v776, 0.0004427343
        %v778 = vsel %vm777, %v775, %v772
        %v779 = vadd.f32 %v763, %v778
        %v780 = vsel %vm764, %v765, %v779
        %781 = vst.msk [vmem:[#allocation4] sm:$0xff] %vm603, %v780
        %782 = vrot.lane.b32.xlu0 %v730, 126
        %v783 = vpop.permute.xlu0 %782
        %vm785 = vcmask 130048
        %786 = vst.msk [vmem:[#allocation6] sm:$0xff] %vm785, %v783
        %787 = vrot.lane.b32.xlu0 %v730, 110
        %v788 = vpop.permute.xlu0 %787
        %790 = vst.msk [vmem:[#allocation7] sm:$0xff] %vm785, %v788
        %v791 = vld [vmem:[#allocation21] sm:$0xff]
        %v792 = vld [vmem:[#allocation21 + $0x8] sm:$0xff]
        %v793 = vmul.f32 %v791, 1.442695
        %v794 = vpow.pop %v793
        %v795 = vmul.f32 %v792, 1.442695
        %v796 = vpow.pop %v795
        %v797 = vsub.f32 0.0, %v794
        %v798 = vsub.f32 0.0, %v796
        %v799 = vld [vmem:[#allocation2] sm:$0xff]
        %v800 = vld [vmem:[#allocation2 + $0x8] sm:$0xff]
        %v801 = vld [vmem:[#allocation4] sm:$0xff]
        %v802 = vld [vmem:[#allocation5] sm:$0xff]
        %v803 = vmul.f32 %v801, %v802
        %v804 = vld [vmem:[#allocation6] sm:$0xff]
        %v805 = vld [vmem:[#allocation7] sm:$0xff]
        %v807 = vcombine.high %v801, %v801
        %v809 = vunpack.c.l.s4 1966171168
        %v810 = vunpack.c.0.s8 %v809
        %v811 = vlaneseq
        %v812 = vshrl.u32 %v811, 7
        %v813 = vsub.s32 %v810, %v812
        %v814 = vrot.slane %v801, %v813
        %v816 = vunpack.c.l.s4 1966171168
        %v817 = vunpack.c.0.s8 %v816
        %v818 = vlaneseq
        %v819 = vshrl.u32 %v818, 7
        %v820 = vsub.s32 %v817, %v819
        %v821 = vrot.slane %v807, %v820
        %v822 = vcombine.high %v814, %v814
        %v823 = vcombine.high %v821, %v821
        %v825 = vunpack.c.l.s4 1966171168
        %v826 = vunpack.c.0.s8 %v825
        %v827 = vlaneseq
        %v828 = vshrl.u32 %v827, 7
        %v829 = vsub.s32 %v826, %v828
        %v830 = vrot.slane %v814, %v829
        %v832 = vunpack.c.l.s4 1966171168
        %v833 = vunpack.c.0.s8 %v832
        %v834 = vlaneseq
        %v835 = vshrl.u32 %v834, 7
        %v836 = vsub.s32 %v833, %v835
        %v837 = vrot.slane %v821, %v836
        %v839 = vunpack.c.l.s4 1966171168
        %v840 = vunpack.c.0.s8 %v839
        %v841 = vlaneseq
        %v842 = vshrl.u32 %v841, 7
        %v843 = vsub.s32 %v840, %v842
        %v844 = vrot.slane %v822, %v843
        %v846 = vunpack.c.l.s4 1966171168
        %v847 = vunpack.c.0.s8 %v846
        %v848 = vlaneseq
        %v849 = vshrl.u32 %v848, 7
        %v850 = vsub.s32 %v847, %v849
        %v851 = vrot.slane %v823, %v850
        %v852 = vcombine.high %v830, %v830
        %v853 = vcombine.high %v837, %v837
        %v854 = vcombine.high %v844, %v844
        %v855 = vcombine.high %v851, %v851
        %v856 = vlaneseq
        %v857 = vshrl.u32 %v856, 7
        %v858 = vsub.s32 0, %v857
        %v859 = vrot.slane %v830, %v858
        %v860 = vlaneseq
        %v861 = vshrl.u32 %v860, 7
        %v862 = vsub.s32 0, %v861
        %v863 = vrot.slane %v844, %v862
        %v864 = vlaneseq
        %v865 = vshrl.u32 %v864, 7
        %v866 = vsub.s32 0, %v865
        %v867 = vrot.slane %v852, %v866
        %v868 = vlaneseq
        %v869 = vshrl.u32 %v868, 7
        %v870 = vsub.s32 0, %v869
        %v871 = vrot.slane %v854, %v870
        %v872 = vlaneseq
        %v873 = vshrl.u32 %v872, 7
        %v874 = vsub.s32 0, %v873
        %v875 = vrot.slane %v837, %v874
        %v876 = vlaneseq
        %v877 = vshrl.u32 %v876, 7
        %v878 = vsub.s32 0, %v877
        %v879 = vrot.slane %v851, %v878
        %v880 = vlaneseq
        %v881 = vshrl.u32 %v880, 7
        %v882 = vsub.s32 0, %v881
        %v883 = vrot.slane %v853, %v882
        %v884 = vlaneseq
        %v885 = vshrl.u32 %v884, 7
        %v886 = vsub.s32 0, %v885
        %v887 = vrot.slane %v855, %v886
        %v896 = vmul.f32 %v859, %v797
        %v897 = vmul.f32 %v859, %v798
        %v898 = vmul.f32 %v863, %v797
        %v899 = vmul.f32 %v863, %v798
        %v900 = vmul.f32 %v867, %v797
        %v901 = vmul.f32 %v867, %v798
        %v902 = vmul.f32 %v871, %v797
        %v903 = vmul.f32 %v871, %v798
        %v904 = vmul.f32 %v875, %v797
        %v905 = vmul.f32 %v875, %v798
        %v906 = vmul.f32 %v879, %v797
        %v907 = vmul.f32 %v879, %v798
        %v908 = vmul.f32 %v883, %v797
        %v909 = vmul.f32 %v883, %v798
        %v910 = vmul.f32 %v887, %v797
        %v911 = vmul.f32 %v887, %v798
        %v912 = vmul.f32 %v896, 1.442695
        %v913 = vpow.pop %v912
        %v914 = vmul.f32 %v897, 1.442695
        %v915 = vpow.pop %v914
        %v916 = vmul.f32 %v898, 1.442695
        %v917 = vpow.pop %v916
        %v918 = vmul.f32 %v899, 1.442695
        %v919 = vpow.pop %v918
        %v920 = vmul.f32 %v900, 1.442695
        %v921 = vpow.pop %v920
        %v922 = vmul.f32 %v901, 1.442695
        %v923 = vpow.pop %v922
        %v924 = vmul.f32 %v902, 1.442695
        %v925 = vpow.pop %v924
        %v926 = vmul.f32 %v903, 1.442695
        %v927 = vpow.pop %v926
        %v928 = vmul.f32 %v904, 1.442695
        %v929 = vpow.pop %v928
        %v930 = vmul.f32 %v905, 1.442695
        %v931 = vpow.pop %v930
        %v932 = vmul.f32 %v906, 1.442695
        %v933 = vpow.pop %v932
        %v934 = vmul.f32 %v907, 1.442695
        %v935 = vpow.pop %v934
        %v936 = vmul.f32 %v908, 1.442695
        %v937 = vpow.pop %v936
        %v938 = vmul.f32 %v909, 1.442695
        %v939 = vpow.pop %v938
        %v940 = vmul.f32 %v910, 1.442695
        %v941 = vpow.pop %v940
        %v942 = vmul.f32 %v911, 1.442695
        %v943 = vpow.pop %v942
        %v945 = vcombine.high %v803, %v803
        %v947 = vunpack.c.l.s4 1966171168
        %v948 = vunpack.c.0.s8 %v947
        %v949 = vlaneseq
        %v950 = vshrl.u32 %v949, 7
        %v951 = vsub.s32 %v948, %v950
        %v952 = vrot.slane %v803, %v951
        %v954 = vunpack.c.l.s4 1966171168
        %v955 = vunpack.c.0.s8 %v954
        %v956 = vlaneseq
        %v957 = vshrl.u32 %v956, 7
        %v958 = vsub.s32 %v955, %v957
        %v959 = vrot.slane %v945, %v958
        %v960 = vcombine.high %v952, %v952
        %v961 = vcombine.high %v959, %v959
        %v963 = vunpack.c.l.s4 1966171168
        %v964 = vunpack.c.0.s8 %v963
        %v965 = vlaneseq
        %v966 = vshrl.u32 %v965, 7
        %v967 = vsub.s32 %v964, %v966
        %v968 = vrot.slane %v952, %v967
        %v970 = vunpack.c.l.s4 1966171168
        %v971 = vunpack.c.0.s8 %v970
        %v972 = vlaneseq
        %v973 = vshrl.u32 %v972, 7
        %v974 = vsub.s32 %v971, %v973
        %v975 = vrot.slane %v959, %v974
        %v977 = vunpack.c.l.s4 1966171168
        %v978 = vunpack.c.0.s8 %v977
        %v979 = vlaneseq
        %v980 = vshrl.u32 %v979, 7
        %v981 = vsub.s32 %v978, %v980
        %v982 = vrot.slane %v960, %v981
        %v984 = vunpack.c.l.s4 1966171168
        %v985 = vunpack.c.0.s8 %v984
        %v986 = vlaneseq
        %v987 = vshrl.u32 %v986, 7
        %v988 = vsub.s32 %v985, %v987
        %v989 = vrot.slane %v961, %v988
        %v990 = vcombine.high %v968, %v968
        %v991 = vcombine.high %v975, %v975
        %v992 = vcombine.high %v982, %v982
        %v993 = vcombine.high %v989, %v989
        %v994 = vlaneseq
        %v995 = vshrl.u32 %v994, 7
        %v996 = vsub.s32 0, %v995
        %v997 = vrot.slane %v804, %v996
        %999 = vbcast.lane.b32.xlu0 %v997, 256
        %v1000 = vpop.permute.xlu0 %999
        %s1002 = sor.u32 256, 8
        %1003 = vbcast.lane.b32.xlu0 %v997, %s1002
        %v1004 = vpop.permute.xlu0 %1003
        %v1005 = vlaneseq
        %v1006 = vshrl.u32 %v1005, 7
        %v1007 = vsub.s32 1, %v1006
        %v1008 = vrot.slane %v804, %v1007
        %1010 = vbcast.lane.b32.xlu0 %v1008, 256
        %v1011 = vpop.permute.xlu0 %1010
        %s1013 = sor.u32 256, 8
        %1014 = vbcast.lane.b32.xlu0 %v1008, %s1013
        %v1015 = vpop.permute.xlu0 %1014
        %v1016 = vlaneseq
        %v1017 = vshrl.u32 %v1016, 7
        %v1018 = vsub.s32 2, %v1017
        %v1019 = vrot.slane %v804, %v1018
        %1021 = vbcast.lane.b32.xlu0 %v1019, 256
        %v1022 = vpop.permute.xlu0 %1021
        %s1024 = sor.u32 256, 8
        %1025 = vbcast.lane.b32.xlu0 %v1019, %s1024
        %v1026 = vpop.permute.xlu0 %1025
        %v1027 = vlaneseq
        %v1028 = vshrl.u32 %v1027, 7
        %v1029 = vsub.s32 3, %v1028
        %v1030 = vrot.slane %v804, %v1029
        %1032 = vbcast.lane.b32.xlu0 %v1030, 256
        %v1033 = vpop.permute.xlu0 %1032
        %s1035 = sor.u32 256, 8
        %1036 = vbcast.lane.b32.xlu0 %v1030, %s1035
        %v1037 = vpop.permute.xlu0 %1036
        %v1038 = vlaneseq
        %v1039 = vshrl.u32 %v1038, 7
        %v1040 = vsub.s32 4, %v1039
        %v1041 = vrot.slane %v804, %v1040
        %1043 = vbcast.lane.b32.xlu0 %v1041, 256
        %v1044 = vpop.permute.xlu0 %1043
        %s1046 = sor.u32 256, 8
        %1047 = vbcast.lane.b32.xlu0 %v1041, %s1046
        %v1048 = vpop.permute.xlu0 %1047
        %v1049 = vlaneseq
        %v1050 = vshrl.u32 %v1049, 7
        %v1051 = vsub.s32 5, %v1050
        %v1052 = vrot.slane %v804, %v1051
        %1054 = vbcast.lane.b32.xlu0 %v1052, 256
        %v1055 = vpop.permute.xlu0 %1054
        %s1057 = sor.u32 256, 8
        %1058 = vbcast.lane.b32.xlu0 %v1052, %s1057
        %v1059 = vpop.permute.xlu0 %1058
        %v1060 = vlaneseq
        %v1061 = vshrl.u32 %v1060, 7
        %v1062 = vsub.s32 6, %v1061
        %v1063 = vrot.slane %v804, %v1062
        %1065 = vbcast.lane.b32.xlu0 %v1063, 256
        %v1066 = vpop.permute.xlu0 %1065
        %s1068 = sor.u32 256, 8
        %1069 = vbcast.lane.b32.xlu0 %v1063, %s1068
        %v1070 = vpop.permute.xlu0 %1069
        %v1071 = vlaneseq
        %v1072 = vshrl.u32 %v1071, 7
        %v1073 = vsub.s32 7, %v1072
        %v1074 = vrot.slane %v804, %v1073
        %1076 = vbcast.lane.b32.xlu0 %v1074, 256
        %v1077 = vpop.permute.xlu0 %1076
        %s1079 = sor.u32 256, 8
        %1080 = vbcast.lane.b32.xlu0 %v1074, %s1079
        %v1081 = vpop.permute.xlu0 %1080
        %v1082 = vlaneseq
        %v1083 = vshrl.u32 %v1082, 7
        %v1084 = vsub.s32 0, %v1083
        %v1085 = vrot.slane %v968, %v1084
        %v1086 = vlaneseq
        %v1087 = vshrl.u32 %v1086, 7
        %v1088 = vsub.s32 0, %v1087
        %v1089 = vrot.slane %v982, %v1088
        %v1090 = vlaneseq
        %v1091 = vshrl.u32 %v1090, 7
        %v1092 = vsub.s32 0, %v1091
        %v1093 = vrot.slane %v990, %v1092
        %v1094 = vlaneseq
        %v1095 = vshrl.u32 %v1094, 7
        %v1096 = vsub.s32 0, %v1095
        %v1097 = vrot.slane %v992, %v1096
        %v1098 = vlaneseq
        %v1099 = vshrl.u32 %v1098, 7
        %v1100 = vsub.s32 0, %v1099
        %v1101 = vrot.slane %v975, %v1100
        %v1102 = vlaneseq
        %v1103 = vshrl.u32 %v1102, 7
        %v1104 = vsub.s32 0, %v1103
        %v1105 = vrot.slane %v989, %v1104
        %v1106 = vlaneseq
        %v1107 = vshrl.u32 %v1106, 7
        %v1108 = vsub.s32 0, %v1107
        %v1109 = vrot.slane %v991, %v1108
        %v1110 = vlaneseq
        %v1111 = vshrl.u32 %v1110, 7
        %v1112 = vsub.s32 0, %v1111
        %v1113 = vrot.slane %v993, %v1112
        %v1122 = vmul.f32 %v1085, %v1000
        %v1123 = vmul.f32 %v1085, %v1004
        %v1124 = vmul.f32 %v1089, %v1011
        %v1125 = vmul.f32 %v1089, %v1015
        %v1126 = vmul.f32 %v1093, %v1022
        %v1127 = vmul.f32 %v1093, %v1026
        %v1128 = vmul.f32 %v1097, %v1033
        %v1129 = vmul.f32 %v1097, %v1037
        %v1130 = vmul.f32 %v1101, %v1044
        %v1131 = vmul.f32 %v1101, %v1048
        %v1132 = vmul.f32 %v1105, %v1055
        %v1133 = vmul.f32 %v1105, %v1059
        %v1134 = vmul.f32 %v1109, %v1066
        %v1135 = vmul.f32 %v1109, %v1070
        %v1136 = vmul.f32 %v1113, %v1077
        %v1137 = vmul.f32 %v1113, %v1081
        %v1138 = vmul.f32 %v913, %v799
        %v1139 = vmul.f32 %v915, %v800
        %v1140 = vadd.f32 %v1138, %v1122
        %v1141 = vadd.f32 %v1139, %v1123
        %v1142 = vmul.f32 %v917, %v1140
        %v1143 = vmul.f32 %v919, %v1141
        %v1144 = vadd.f32 %v1142, %v1124
        %v1145 = vadd.f32 %v1143, %v1125
        %v1146 = vmul.f32 %v921, %v1144
        %v1147 = vmul.f32 %v923, %v1145
        %v1148 = vadd.f32 %v1146, %v1126
        %v1149 = vadd.f32 %v1147, %v1127
        %v1150 = vmul.f32 %v925, %v1148
        %v1151 = vmul.f32 %v927, %v1149
        %v1152 = vadd.f32 %v1150, %v1128
        %v1153 = vadd.f32 %v1151, %v1129
        %v1154 = vmul.f32 %v929, %v1152
        %v1155 = vmul.f32 %v931, %v1153
        %v1156 = vadd.f32 %v1154, %v1130
        %v1157 = vadd.f32 %v1155, %v1131
        %v1158 = vmul.f32 %v933, %v1156
        %v1159 = vmul.f32 %v935, %v1157
        %v1160 = vadd.f32 %v1158, %v1132
        %v1161 = vadd.f32 %v1159, %v1133
        %v1162 = vmul.f32 %v937, %v1160
        %v1163 = vmul.f32 %v939, %v1161
        %v1164 = vadd.f32 %v1162, %v1134
        %v1165 = vadd.f32 %v1163, %v1135
        %v1166 = vmul.f32 %v941, %v1164
        %v1167 = vmul.f32 %v943, %v1165
        %v1168 = vadd.f32 %v1166, %v1136
        %v1169 = vadd.f32 %v1167, %v1137
        %v1170 = vlaneseq
        %v1171 = vshrl.u32 %v1170, 7
        %v1172 = vsub.s32 0, %v1171
        %v1173 = vrot.slane %v805, %v1172
        %1175 = vbcast.lane.b32.xlu0 %v1173, 256
        %v1176 = vpop.permute.xlu0 %1175
        %s1178 = sor.u32 256, 8
        %1179 = vbcast.lane.b32.xlu0 %v1173, %s1178
        %v1180 = vpop.permute.xlu0 %1179
        %v1181 = vlaneseq
        %v1182 = vshrl.u32 %v1181, 7
        %v1183 = vsub.s32 1, %v1182
        %v1184 = vrot.slane %v805, %v1183
        %1186 = vbcast.lane.b32.xlu0 %v1184, 256
        %v1187 = vpop.permute.xlu0 %1186
        %s1189 = sor.u32 256, 8
        %1190 = vbcast.lane.b32.xlu0 %v1184, %s1189
        %v1191 = vpop.permute.xlu0 %1190
        %v1192 = vlaneseq
        %v1193 = vshrl.u32 %v1192, 7
        %v1194 = vsub.s32 2, %v1193
        %v1195 = vrot.slane %v805, %v1194
        %1197 = vbcast.lane.b32.xlu0 %v1195, 256
        %v1198 = vpop.permute.xlu0 %1197
        %s1200 = sor.u32 256, 8
        %1201 = vbcast.lane.b32.xlu0 %v1195, %s1200
        %v1202 = vpop.permute.xlu0 %1201
        %v1203 = vlaneseq
        %v1204 = vshrl.u32 %v1203, 7
        %v1205 = vsub.s32 3, %v1204
        %v1206 = vrot.slane %v805, %v1205
        %1208 = vbcast.lane.b32.xlu0 %v1206, 256
        %v1209 = vpop.permute.xlu0 %1208
        %s1211 = sor.u32 256, 8
        %1212 = vbcast.lane.b32.xlu0 %v1206, %s1211
        %v1213 = vpop.permute.xlu0 %1212
        %v1214 = vlaneseq
        %v1215 = vshrl.u32 %v1214, 7
        %v1216 = vsub.s32 4, %v1215
        %v1217 = vrot.slane %v805, %v1216
        %1219 = vbcast.lane.b32.xlu0 %v1217, 256
        %v1220 = vpop.permute.xlu0 %1219
        %s1222 = sor.u32 256, 8
        %1223 = vbcast.lane.b32.xlu0 %v1217, %s1222
        %v1224 = vpop.permute.xlu0 %1223
        %v1225 = vlaneseq
        %v1226 = vshrl.u32 %v1225, 7
        %v1227 = vsub.s32 5, %v1226
        %v1228 = vrot.slane %v805, %v1227
        %1230 = vbcast.lane.b32.xlu0 %v1228, 256
        %v1231 = vpop.permute.xlu0 %1230
        %s1233 = sor.u32 256, 8
        %1234 = vbcast.lane.b32.xlu0 %v1228, %s1233
        %v1235 = vpop.permute.xlu0 %1234
        %v1236 = vlaneseq
        %v1237 = vshrl.u32 %v1236, 7
        %v1238 = vsub.s32 6, %v1237
        %v1239 = vrot.slane %v805, %v1238
        %1241 = vbcast.lane.b32.xlu0 %v1239, 256
        %v1242 = vpop.permute.xlu0 %1241
        %s1244 = sor.u32 256, 8
        %1245 = vbcast.lane.b32.xlu0 %v1239, %s1244
        %v1246 = vpop.permute.xlu0 %1245
        %v1247 = vlaneseq
        %v1248 = vshrl.u32 %v1247, 7
        %v1249 = vsub.s32 7, %v1248
        %v1250 = vrot.slane %v805, %v1249
        %1252 = vbcast.lane.b32.xlu0 %v1250, 256
        %v1253 = vpop.permute.xlu0 %1252
        %s1255 = sor.u32 256, 8
        %1256 = vbcast.lane.b32.xlu0 %v1250, %s1255
        %v1257 = vpop.permute.xlu0 %1256
        %v1258 = vmul.f32 %v1140, %v1176
        %v1259 = vmul.f32 %v1141, %v1180
        %v1260 = vmul.f32 %v1144, %v1187
        %v1261 = vmul.f32 %v1145, %v1191
        %v1262 = vmul.f32 %v1148, %v1198
        %v1263 = vmul.f32 %v1149, %v1202
        %v1264 = vmul.f32 %v1152, %v1209
        %v1265 = vmul.f32 %v1153, %v1213
        %v1266 = vmul.f32 %v1156, %v1220
        %v1267 = vmul.f32 %v1157, %v1224
        %v1268 = vmul.f32 %v1160, %v1231
        %v1269 = vmul.f32 %v1161, %v1235
        %v1270 = vmul.f32 %v1164, %v1242
        %v1271 = vmul.f32 %v1165, %v1246
        %v1272 = vmul.f32 %v1168, %v1253
        %v1273 = vmul.f32 %v1169, %v1257
        %v1274 = vsel %vm603, %v1258, 0.0
        %v1275 = vsel %vm603, %v1259, 0.0
        %v1276 = vadd.f32 %v1274, %v1275
        %v1277 = vrot.slane %v1276, 4
        %v1278 = vadd.f32 %v1276, %v1277
        %v1279 = vrot.slane %v1278, 2
        %v1280 = vadd.f32 %v1278, %v1279
        %v1281 = vrot.slane %v1280, 1
        %v1282 = vadd.f32 %v1280, %v1281
        %v1283 = vsel %vm603, %v1260, 0.0
        %v1284 = vsel %vm603, %v1261, 0.0
        %v1285 = vadd.f32 %v1283, %v1284
        %v1286 = vrot.slane %v1285, 4
        %v1287 = vadd.f32 %v1285, %v1286
        %v1288 = vrot.slane %v1287, 2
        %v1289 = vadd.f32 %v1287, %v1288
        %v1290 = vrot.slane %v1289, 1
        %v1291 = vadd.f32 %v1289, %v1290
        %v1292 = vsel %vm603, %v1262, 0.0
        %v1293 = vsel %vm603, %v1263, 0.0
        %v1294 = vadd.f32 %v1292, %v1293
        %v1295 = vrot.slane %v1294, 4
        %v1296 = vadd.f32 %v1294, %v1295
        %v1297 = vrot.slane %v1296, 2
        %v1298 = vadd.f32 %v1296, %v1297
        %v1299 = vrot.slane %v1298, 1
        %v1300 = vadd.f32 %v1298, %v1299
        %v1301 = vsel %vm603, %v1264, 0.0
        %v1302 = vsel %vm603, %v1265, 0.0
        %v1303 = vadd.f32 %v1301, %v1302
        %v1304 = vrot.slane %v1303, 4
        %v1305 = vadd.f32 %v1303, %v1304
        %v1306 = vrot.slane %v1305, 2
        %v1307 = vadd.f32 %v1305, %v1306
        %v1308 = vrot.slane %v1307, 1
        %v1309 = vadd.f32 %v1307, %v1308
        %v1310 = vsel %vm603, %v1266, 0.0
        %v1311 = vsel %vm603, %v1267, 0.0
        %v1312 = vadd.f32 %v1310, %v1311
        %v1313 = vrot.slane %v1312, 4
        %v1314 = vadd.f32 %v1312, %v1313
        %v1315 = vrot.slane %v1314, 2
        %v1316 = vadd.f32 %v1314, %v1315
        %v1317 = vrot.slane %v1316, 1
        %v1318 = vadd.f32 %v1316, %v1317
        %v1319 = vsel %vm603, %v1268, 0.0
        %v1320 = vsel %vm603, %v1269, 0.0
        %v1321 = vadd.f32 %v1319, %v1320
        %v1322 = vrot.slane %v1321, 4
        %v1323 = vadd.f32 %v1321, %v1322
        %v1324 = vrot.slane %v1323, 2
        %v1325 = vadd.f32 %v1323, %v1324
        %v1326 = vrot.slane %v1325, 1
        %v1327 = vadd.f32 %v1325, %v1326
        %v1328 = vsel %vm603, %v1270, 0.0
        %v1329 = vsel %vm603, %v1271, 0.0
        %v1330 = vadd.f32 %v1328, %v1329
        %v1331 = vrot.slane %v1330, 4
        %v1332 = vadd.f32 %v1330, %v1331
        %v1333 = vrot.slane %v1332, 2
        %v1334 = vadd.f32 %v1332, %v1333
        %v1335 = vrot.slane %v1334, 1
        %v1336 = vadd.f32 %v1334, %v1335
        %v1337 = vsel %vm603, %v1272, 0.0
        %v1338 = vsel %vm603, %v1273, 0.0
        %v1339 = vadd.f32 %v1337, %v1338
        %v1340 = vrot.slane %v1339, 4
        %v1341 = vadd.f32 %v1339, %v1340
        %v1342 = vrot.slane %v1341, 2
        %v1343 = vadd.f32 %v1341, %v1342
        %v1344 = vrot.slane %v1343, 1
        %v1345 = vadd.f32 %v1343, %v1344
        %vm1354 = vcmask 1041409
        %v1355 = vsel %vm1354, %v1291, %v1282
        %vm1356 = vcmask 1042434
        %v1357 = vsel %vm1356, %v1300, %v1355
        %vm1358 = vcmask 1043459
        %v1359 = vsel %vm1358, %v1309, %v1357
        %vm1360 = vcmask 1044484
        %v1361 = vsel %vm1360, %v1318, %v1359
        %vm1362 = vcmask 1045509
        %v1363 = vsel %vm1362, %v1327, %v1361
        %vm1364 = vcmask 1046534
        %v1365 = vsel %vm1364, %v1336, %v1363
        %vm1366 = vcmask 1047559
        %v1367 = vsel %vm1366, %v1345, %v1365
        %1369 = vst.msk [vmem:[#allocation8] sm:$0xff] %vm603, %v1367
        %1370 = vst.msk [vmem:[#allocation2] sm:$0xff] %vm603, %v1168
        %1371 = vst.msk [vmem:[#allocation2 + $0x8] sm:$0xff] %vm603, %v1169
        %v1372 = vld [vmem:[#allocation8] sm:$0xff]
        %v1373 = vld [vmem:[#allocation23] sm:$0x1]
        %v1374 = vld [vmem:[#allocation5] sm:$0xff]
        %v1376 = vlaneseq
        %v1377 = vshrl.u32 %v1376, 7
        %v1378 = vsub.s32 0, %v1377
        %v1379 = vrot.slane %v1373, %v1378
        %v1381 = vmul.f32 %v1379, %v1374
        %v1382 = vadd.f32 %v1372, %v1381
        %v1383 = vxor.u32 %v600, 2147483648
        %v1384 = vmul.f32 %v1383, 1.442695
        %v1385 = vpow.pop %v1384
        %v1386 = vadd.f32 %v1385, 1.0
        %v1387 = vrcp.pop %v1386
        %v1388 = vmul.f32 1.0, %v1387
        %v1389 = vmul.f32 %v600, %v1388
        %1391 = vrot.lane.b32.xlu0 %v1389, 64
        %v1392 = vpop.permute.xlu0 %1391
        %v1394 = vmul.f32 %v1382, %v1392
        %v1395 = vld [vmem:[#allocation24] sm:$0xff]
        %v1396 = vld [vmem:[#allocation24 + $0x8] sm:$0xff]
        %v1397 = vld [vmem:[#allocation24 + $0x10] sm:$0xff]
        %v1398 = vld [vmem:[#allocation24 + $0x18] sm:$0xff]
        %v1399 = vld [vmem:[#allocation24 + $0x20] sm:$0xff]
        %v1400 = vld [vmem:[#allocation24 + $0x28] sm:$0xff]
        %v1401 = vld [vmem:[#allocation24 + $0x30] sm:$0xff]
        %v1402 = vld [vmem:[#allocation24 + $0x38] sm:$0xff]
        %v1404 = vsel %vm603, %v1394, 0
        %1406 = vmatprep.subr.mxu0 0.0
        %1407 = vmatpush1.msra.mxu0 %v1395
        %1408 = vmatprep.subr.mxu0 0.0
        %1409 = vmatpush1.msra.mxu0 %v1396
        %1410 = vmatprep.subr.mxu0 0.0
        %1411 = vmatpush1.msra.mxu0 %v1397
        %1412 = vmatprep.subr.mxu0 0.0
        %1413 = vmatpush1.msra.mxu0 %v1398
        %1414 = vmatprep.subr.mxu0 0.0
        %1415 = vmatpush1.msra.mxu0 %v1399
        %1416 = vmatprep.subr.mxu0 0.0
        %1417 = vmatpush1.msra.mxu0 %v1400
        %1418 = vmatprep.subr.mxu0 0.0
        %1419 = vmatpush1.msra.mxu0 %v1401
        %1420 = vmatprep.subr.mxu0 0.0
        %1421 = vmatpush1.msra.mxu0 %v1402
        %1422 = vmatprep.subr.mxu0 0.0
        %1423 = vmatpush1.msra.mxu0 0.0
        %1424 = vmatprep.subr.mxu0 0.0
        %1425 = vmatpush1.msra.mxu0 0.0
        %1426 = vmatprep.subr.mxu0 0.0
        %1427 = vmatpush1.msra.mxu0 0.0
        %1428 = vmatprep.subr.mxu0 0.0
        %1429 = vmatpush1.msra.mxu0 0.0
        %1430 = vmatprep.subr.mxu0 0.0
        %1431 = vmatpush1.msra.mxu0 0.0
        %1432 = vmatprep.subr.mxu0 0.0
        %1433 = vmatpush1.msra.mxu0 0.0
        %1434 = vmatprep.subr.mxu0 0.0
        %1435 = vmatpush1.msra.mxu0 0.0
        %1436 = vmatprep.subr.mxu0 0.0
        %1437 = vmatpush1.msra.mxu0 0.0
        %1438 = vmatprep.subr.mxu0 0.0
        %1439 = vmatpush1.msra.mxu0 0.0
        %1440 = vmatprep.subr.mxu0 0.0
        %1441 = vmatpush1.msra.mxu0 0.0
        %1442 = vmatprep.subr.mxu0 0.0
        %1443 = vmatpush1.msra.mxu0 0.0
        %1444 = vmatprep.subr.mxu0 0.0
        %1445 = vmatpush1.msra.mxu0 0.0
        %1446 = vmatprep.subr.mxu0 0.0
        %1447 = vmatpush1.msra.mxu0 0.0
        %1448 = vmatprep.subr.mxu0 0.0
        %1449 = vmatpush1.msra.mxu0 0.0
        %1450 = vmatprep.subr.mxu0 0.0
        %1451 = vmatpush1.msra.mxu0 0.0
        %1452 = vmatprep.subr.mxu0 0.0
        %1453 = vmatpush1.msra.mxu0 0.0
        %1454 = vmatprep.subr.mxu0 0.0
        %1455 = vmatpush1.msra.mxu0 0.0
        %1456 = vmatprep.subr.mxu0 0.0
        %1457 = vmatpush1.msra.mxu0 0.0
        %1458 = vmatprep.subr.mxu0 0.0
        %1459 = vmatpush1.msra.mxu0 0.0
        %1460 = vmatprep.subr.mxu0 0.0
        %1461 = vmatpush1.msra.mxu0 0.0
        %1462 = vmatprep.subr.mxu0 0.0
        %1463 = vmatpush1.msra.mxu0 0.0
        %1464 = vmatprep.subr.mxu0 0.0
        %1465 = vmatpush1.msra.mxu0 0.0
        %1466 = vmatprep.subr.mxu0 0.0
        %1467 = vmatpush1.msra.mxu0 0.0
        %1468 = vmatprep.subr.mxu0 0.0
        %1469 = vmatpush1.msra.mxu0 0.0
        %1470 = vmatprep.mubr.f32.mxu0 0.0
        %1471 = vmatmul.mubr.f32.gmra.mrb[0].mxu0 %v1404
        %v1472 = vpop.f32.mrb[0].mxu0
        %v1473 = vadd.f32 0.0, %v1472
        %v1474 = vpop.f32.mrb[0].mxu0
        %1475 = vdwg.mxu0
        %1476 = vst.msk [vmem:[%s513] sm:$0xff] %vm529, %v1473
        %s1477 = sand.u32 %s271, 1
        %s1478 = scalar_lea.sflag [#allocation11], %s1477
        %s1479 = sand.u32 %s271, 1
        %s1480 = smul.addr %s1479, 8
        %s1481 = scalar_lea.vmem [#allocation26], %s1480
        // Predicated region
        $region105: #{tpu_custom_call.1} parent=59 // pred_check
          %p1482 = pneg %p281
        $region106: #{tpu_custom_call.1} parent=59 // pred_check_branch
          %1484 = sbr.rel (%p1482) target = $region108
        $region107: #{tpu_custom_call.1} parent=59 // pred_region
          %s1486 = ssub.s32 128, 128
          %1487 = vsyncadd %s1478, %s1486
          %s1488 = smul.addr %s36, 2
          %s1489 = sadd.s32 %s37, %s1488
          %s1490 = smul.addr %s1489, 128
          %s1491 = scalar_lea.hbm %s10, %s1490
          %s1493 = sshll.u32 %s1481, 4
          %s1494 = int_to_ptr.vmem [resolvable:$true] %s1493
          %1496 = dma.vmem_to_hbm [thread:$0]  %s1494, 128, %s1491, %s1478
        $region108: #{tpu_custom_call.1} parent=59 // pred_fallthru
          _
      $region60: #{tpu_custom_call.1} parent=5 // pred_fallthru
        _
      %p1497 = scmp.le.s32.totalorder 2, %s27
      // Predicated region
      $region109: #{tpu_custom_call.1} parent=5 // pred_check
        %p1498 = pneg %p1497
      $region110: #{tpu_custom_call.1} parent=5 // pred_check_branch
        %1500 = sbr.rel (%p1498) target = $region112
      $region111: #{tpu_custom_call.1} parent=5 // pred_region
        %s1501 = ssub.s32 %s27, 2
        // Predicated region
        $region113: #{tpu_custom_call.1} parent=111 // pred_check
          %p1502 = pneg %p287
        $region114: #{tpu_custom_call.1} parent=111 // pred_check_branch
          %1504 = sbr.rel (%p1502) target = $region116
        $region115: #{tpu_custom_call.1} parent=111 // pred_region
          %s1505 = sand.u32 %s272, 1
          %s1506 = scalar_lea.sflag [#allocation11], %s1505
          %s1507 = sand.u32 %s272, 1
          %s1508 = smul.addr %s1507, 8
          %s1509 = scalar_lea.vmem [#allocation26], %s1508
          %1510 = dma.done %s1506, 128
        $region116: #{tpu_custom_call.1} parent=111 // pred_fallthru
          _
      $region112: #{tpu_custom_call.1} parent=5 // pred_fallthru
        _
    $region6: #{tpu_custom_call.1} parent=1 // loop_footer
      %s31 = sadd.s32 1, %s27
    $region7: #{tpu_custom_call.1} parent=1 // loop_footer_branch
      %26 = sbr.rel target = $region3
    $region8: #{tpu_custom_call.1} parent=1 // loop_exit
      _
    %1511 = vsyncpa [#allocation10], 1
    %s1512 = scalar_lea.sflag [#allocation10], 1
    %1513 = vsyncpa %s1512, 1
    %1514 = vsyncpa [#allocation13], 1
    %1515 = vsyncpa [#allocation16], 1
    %1516 = vsyncpa [#allocation19], 1
    %1517 = vsyncpa [#allocation22], 1
    %1518 = vsyncpa [#allocation25], 1
    %1519 = vsyncpa [#allocation11], 1
    %s1520 = scalar_lea.sflag [#allocation11], 1
    %1521 = vsyncpa %s1520, 1

</llo_original>
